<compile_context>
chip_gen: v7x
topology: tpu7x:2x2x1
jax: 0.10.0
libtpu: 0.0.40
codegen_flags: <defaults>
</compile_context>

<pallas_src>
import jax
import jax.numpy as jnp
from jax import lax
from jax.experimental import pallas as pl
from jax.experimental.pallas import tpu as pltpu


# --------------------------------------------------------------------------
# Fused kernel: LSTM recurrence + ReLU + Linear + CRF (gold emissions + logZ)
# --------------------------------------------------------------------------
def entity_labeler_kernel(x_ref, gslab_ref, lslab_ref, out_ref):
    TB, E = x_ref.shape            # (T*Bp, E)
    G = gslab_ref.shape[1]         # 4H
    H = G // 4
    L = lslab_ref.shape[1]
    B = out_ref.shape[0]           # padded batch (multiple of 8)
    T = TB // B

    # ---- unpack packed slabs with static, tile-aligned slices -------------
    w_ih_t = gslab_ref[0:E, :]                     # (E, 4H)
    w_hh_t = gslab_ref[E:E + H, :]                 # (H, 4H)
    b_gate = gslab_ref[E + H:E + H + 1, :]         # (1, 4H)

    w_lin_t = lslab_ref[0:H, :]                    # (H, L)
    exp_trans = lslab_ref[H:H + L, :]              # (L, L) = exp(trans - colmax)
    coff = H + L
    b_lin = lslab_ref[coff + 0:coff + 1, :]        # (1, L)
    start = lslab_ref[coff + 1:coff + 2, :]        # (1, L)
    e_end = lslab_ref[coff + 2:coff + 3, :]        # (1, L) = exp(end - max(end))
    tmax = lslab_ref[coff + 3:coff + 4, :]         # (1, L) = colmax(trans)
    oh_off = coff + 8                              # gold one-hot rows
    mk_off = oh_off + T * B                        # mask rows (pre-broadcast to L lanes)

    # ---- time-parallel input projection: one MXU matmul over all steps ----
    xg = jnp.dot(x_ref[...], w_ih_t, preferred_element_type=jnp.float32) + b_gate  # (T*B, 4H)

    # Hoisted sublane broadcasts of exp_trans rows (static -> done once).
    et_rows = [jnp.broadcast_to(exp_trans[i:i + 1, :], (B, L)) for i in range(L)]

    h = jnp.zeros((B, H), jnp.float32)
    c = jnp.zeros((B, H), jnp.float32)
    emis_num = jnp.zeros((B, L), jnp.float32)
    alpha = None
    shift = None

    # Fully unrolled over T (static, small): LSTM cell + emissions + CRF forward step.
    for t in range(T):
        # ---- LSTM cell (batched over B); w_hh_t is loop-invariant (MXU push hoisted).
        g = xg[t * B:(t + 1) * B, :] + jnp.dot(
            h, w_hh_t, preferred_element_type=jnp.float32)          # (B, 4H)
        sg = jax.nn.sigmoid(g)     # one EUP pass over the full gate vreg
        tg = jnp.tanh(g)           # one EUP pass
        c = sg[:, H:2 * H] * c + sg[:, 0:H] * tg[:, 2 * H:3 * H]
        h = sg[:, 3 * H:4 * H] * jnp.tanh(c)

        # ---- dropout (eval) = identity; ReLU; Linear -> emissions (B, L)
        emis_t = jnp.dot(jnp.maximum(h, 0.0), w_lin_t,
                         preferred_element_type=jnp.float32) + b_lin

        # ---- gold-path emission score (one-hot pre-masked in the wrapper, pad rows = 0)
        emis_num = emis_num + emis_t * lslab_ref[oh_off + t * B:oh_off + (t + 1) * B, :]

        # ---- CRF forward recursion, scaled-alpha / probability domain.
        #      score_t = shift + log(alpha_t); shift fixed at t=0 (single log at the end).
        if t == 0:
            score0 = start + emis_t                                  # (B, L)
            shift = jnp.max(score0, axis=-1, keepdims=True)          # (B, 1)
            alpha = jnp.exp(score0 - shift)
        else:
            e_t = jnp.exp(emis_t + tmax)                             # (B, L)
            # (B,L) x (L,L) contraction as unrolled VPU MAC (off the MXU, shorter latency).
            terms = [alpha[:, i:i + 1] * et_rows[i] for i in range(L)]
            while len(terms) > 1:
                terms = [terms[k] + terms[k + 1] for k in range(0, len(terms), 2)]
            raw = terms[0] * e_t
            keep = lslab_ref[mk_off + t * B:mk_off + (t + 1) * B, :]  # (B, L) 0/1
            alpha = jnp.where(keep > 0.0, raw, alpha)

    # denom (minus the global max(end) shift, added back in the wrapper) and gold emissions.
    denom = shift + jnp.log(jnp.sum(alpha * e_end, axis=-1, keepdims=True))   # (B, 1)
    part = denom - jnp.sum(emis_num, axis=-1, keepdims=True)                  # (B, 1)
    # Lane-dense output: one unmasked store of a full (8, 128) tile.
    out_ref[...] = jnp.broadcast_to(part, (B, 128))


# --------------------------------------------------------------------------
# Wrapper: embedding gather, slab packing, gold-path transition score, pallas_call
# --------------------------------------------------------------------------
@jax.jit
def entity_labeler_loss(params, src_input, labels, masks):
    # Embedding lookup (gather) stays in plain JAX glue.
    x = jnp.take(params['embedding'], src_input, axis=0).astype(jnp.float32)  # (B,T,E)
    B, T, E = x.shape
    H = params['w_hh'].shape[1]
    L = params['w_lin'].shape[0]
    G = 4 * H
    B_pad = max(8, -(-B // 8) * 8)          # pad batch to a full sublane group
    pad_b = B_pad - B

    # ---- packed slab 1: gate weights (width 4H) ---------------------------
    w_ih_t = params['w_ih'].T                                     # (E, 4H)
    w_hh_t = params['w_hh'].T                                     # (H, 4H)
    b_gate = (params['b_ih'] + params['b_hh']).reshape(1, G)      # (1, 4H)
    gslab = jnp.concatenate(
        [w_ih_t, w_hh_t, b_gate, jnp.zeros((7, G), jnp.float32)], axis=0)  # (E+H+8, 4H)

    # ---- packed slab 2: everything of width L -----------------------------
    w_lin_t = params['w_lin'].T                                   # (H, L)
    trans = params['crf_trans']                                   # (L, L)
    tmax = jnp.max(trans, axis=0, keepdims=True)                  # (1, L)
    exp_trans = jnp.exp(trans - tmax)                             # robust LSE trick
    b_lin = params['b_lin'].reshape(1, L)
    start = params['crf_start'].reshape(1, L)
    end = params['crf_end']
    end_max = jnp.max(end)
    e_end = jnp.exp(end - end_max).reshape(1, L)

    maskf = masks.astype(jnp.float32)                             # (B, T)
    # Gold-path emission gather as pre-masked one-hot (torchcrf: t=0 always counted).
    mask_num = maskf.at[:, 0].set(1.0)
    onehot = jax.nn.one_hot(labels, L, dtype=jnp.float32) * mask_num[:, :, None]

    # Pad batch, go time-major / batch-contiguous so each step is an aligned 8-row block.
    x_p = jnp.pad(x, ((0, pad_b), (0, 0), (0, 0)))
    oh_p = jnp.pad(onehot, ((0, pad_b), (0, 0), (0, 0)))
    mk_p = jnp.pad(maskf, ((0, pad_b), (0, 0)))
    x_flat = jnp.transpose(x_p, (1, 0, 2)).reshape(T * B_pad, E)
    oh_flat = jnp.transpose(oh_p, (1, 0, 2)).reshape(T * B_pad, L)
    mk_bcast = jnp.broadcast_to(mk_p.T[:, :, None], (T, B_pad, L)).reshape(T * B_pad, L)

    consts = jnp.concatenate(
        [b_lin, start, e_end, tmax, jnp.zeros((4, L), jnp.float32)], axis=0)   # (8, L)
    lslab = jnp.concatenate([w_lin_t, exp_trans, consts, oh_flat, mk_bcast], axis=0)

    flops = 2 * T * B_pad * (E * G + H * G + H * L + L * L)
    transcend = T * B_pad * (2 * G + H + L)
    bytes_accessed = 4 * (x_flat.size + gslab.size + lslab.size + B_pad * 128)

    out = pl.pallas_call(
        entity_labeler_kernel,
        out_shape=jax.ShapeDtypeStruct((B_pad, 128), jnp.float32),
        in_specs=[pl.BlockSpec(memory_space=pltpu.MemorySpace.VMEM)] * 3,
        out_specs=pl.BlockSpec(memory_space=pltpu.MemorySpace.VMEM),
        cost_estimate=pl.CostEstimate(flops=flops, transcendentals=transcend,
                                      bytes_accessed=bytes_accessed),
    )(x_flat, gslab, lslab)

    # Only the first B rows are real sequences (padded rows' logZ is garbage by design).
    part = jnp.sum(out[:B, 0]) + B * end_max

    # Gold-path start/transition/end score: tiny gathers, handled by XLA for free.
    b_idx = jnp.arange(B)
    trans_path = params['crf_start'][labels[:, 0]]
    trans_path = trans_path + jnp.sum(
        trans[labels[:, :-1], labels[:, 1:]] * maskf[:, 1:], axis=1)
    last = masks.astype(jnp.int32).sum(axis=1) - 1
    trans_path = trans_path + end[labels[b_idx, last]]

    # loss = sum_b logZ_b - sum_b (gold emission + gold transition score)
    return part - jnp.sum(trans_path)


# --------------------------------------------------------------------------
# Pure-JAX reference (same semantics) for a correctness check.
# --------------------------------------------------------------------------
def reference_loss(params, src_input, labels, masks):
    x = jnp.take(params['embedding'], src_input, axis=0).astype(jnp.float32)
    B, T, E = x.shape
    H = params['w_hh'].shape[1]

    def cell(carry, xt):
        h, c = carry
        g = (xt @ params['w_ih'].T + h @ params['w_hh'].T
             + params['b_ih'] + params['b_hh'])
        i, f, gg, o = jnp.split(g, 4, axis=-1)
        c = jax.nn.sigmoid(f) * c + jax.nn.sigmoid(i) * jnp.tanh(gg)
        h = jax.nn.sigmoid(o) * jnp.tanh(c)
        return (h, c), h

    h0 = jnp.zeros((B, H), jnp.float32)
    c0 = jnp.zeros((B, H), jnp.float32)
    _, hs = lax.scan(cell, (h0, c0), jnp.swapaxes(x, 0, 1))
    hs = jnp.swapaxes(hs, 0, 1)                                   # (B, T, H)
    emis = jnp.maximum(hs, 0.0) @ params['w_lin'].T + params['b_lin']

    start, end, trans = (params['crf_start'], params['crf_end'],
                         params['crf_trans'])
    maskf = masks.astype(jnp.float32)
    b_idx = jnp.arange(B)

    num = start[labels[:, 0]] + emis[b_idx, 0, labels[:, 0]]
    for t in range(1, T):
        num = num + maskf[:, t] * (trans[labels[:, t - 1], labels[:, t]]
                                   + emis[b_idx, t, labels[:, t]])
    last = masks.astype(jnp.int32).sum(axis=1) - 1
    num = num + end[labels[b_idx, last]]

    score = start[None, :] + emis[:, 0, :]
    for t in range(1, T):
        nxt = (jax.scipy.special.logsumexp(
            score[:, :, None] + trans[None, :, :], axis=1) + emis[:, t, :])
        score = jnp.where(masks[:, t:t + 1] > 0, nxt, score)
    denom = jax.scipy.special.logsumexp(score + end[None, :], axis=1)
    return -(num - denom).sum()


if __name__ == "__main__":
    VOCAB, EMBED, HIDDEN, LABELS = 50, 32, 32, 8
    B, T = 2, 8

    key = jax.random.PRNGKey(0)
    ks = jax.random.split(key, 13)

    def u(k, shape, scale=0.1):
        return jax.random.uniform(k, shape, jnp.float32, -scale, scale)

    params = {
        'embedding': u(ks[0], (VOCAB, EMBED), 0.5),
        'w_ih': u(ks[1], (4 * HIDDEN, EMBED)),
        'w_hh': u(ks[2], (4 * HIDDEN, HIDDEN)),
        'b_ih': u(ks[3], (4 * HIDDEN,)),
        'b_hh': u(ks[4], (4 * HIDDEN,)),
        'w_lin': u(ks[5], (LABELS, HIDDEN)),
        'b_lin': u(ks[6], (LABELS,)),
        'crf_start': u(ks[7], (LABELS,)),
        'crf_end': u(ks[8], (LABELS,)),
        'crf_trans': u(ks[9], (LABELS, LABELS)),
    }

    src_input = jax.random.randint(ks[10], (B, T), 0, VOCAB, dtype=jnp.int32)
    labels = jax.random.randint(ks[11], (B, T), 0, LABELS, dtype=jnp.int32)
    lengths = jnp.array([T, T - 2], dtype=jnp.int32)          # ragged seqs
    masks = (jnp.arange(T)[None, :] < lengths[:, None]).astype(jnp.int32)

    loss = entity_labeler_loss(params, src_input, labels, masks)
    loss = jax.block_until_ready(loss)

    ref = reference_loss(params, src_input, labels, masks)
    assert jnp.allclose(loss, ref, rtol=2e-3, atol=2e-3), (loss, ref)

    print("KERNEL_OK")
</pallas_src>

<mosaic_0001>
module attributes {stable_mosaic.version = 11 : i64} {
  func.func @entity_labeler_kernel(%arg0: memref<64x32xf32, #tpu.memory_space<vmem>>, %arg1: memref<72x128xf32, #tpu.memory_space<vmem>>, %arg2: memref<176x8xf32, #tpu.memory_space<vmem>>, %arg3: memref<8x128xf32, #tpu.memory_space<vmem>>) attributes {dimension_semantics = [], scalar_prefetch = 0 : i64, scratch_operands = 0 : i64, tpu.core_type = #tpu.core_type<tc>} {
    %c0 = arith.constant 0 : index
    %c0_0 = arith.constant 0 : index
    %0 = vector.load %arg1[%c0, %c0_0] : memref<72x128xf32, #tpu.memory_space<vmem>>, vector<32x128xf32>
    %c32 = arith.constant 32 : index
    %c0_1 = arith.constant 0 : index
    %1 = vector.load %arg1[%c32, %c0_1] : memref<72x128xf32, #tpu.memory_space<vmem>>, vector<32x128xf32>
    %c64 = arith.constant 64 : index
    %c0_2 = arith.constant 0 : index
    %2 = vector.load %arg1[%c64, %c0_2] : memref<72x128xf32, #tpu.memory_space<vmem>>, vector<1x128xf32>
    %c0_3 = arith.constant 0 : index
    %c0_4 = arith.constant 0 : index
    %3 = vector.load %arg2[%c0_3, %c0_4] : memref<176x8xf32, #tpu.memory_space<vmem>>, vector<32x8xf32>
    %c32_5 = arith.constant 32 : index
    %c0_6 = arith.constant 0 : index
    %4 = vector.load %arg2[%c32_5, %c0_6] : memref<176x8xf32, #tpu.memory_space<vmem>>, vector<8x8xf32>
    %c40 = arith.constant 40 : index
    %c0_7 = arith.constant 0 : index
    %5 = vector.load %arg2[%c40, %c0_7] : memref<176x8xf32, #tpu.memory_space<vmem>>, vector<1x8xf32>
    %c41 = arith.constant 41 : index
    %c0_8 = arith.constant 0 : index
    %6 = vector.load %arg2[%c41, %c0_8] : memref<176x8xf32, #tpu.memory_space<vmem>>, vector<1x8xf32>
    %c42 = arith.constant 42 : index
    %c0_9 = arith.constant 0 : index
    %7 = vector.load %arg2[%c42, %c0_9] : memref<176x8xf32, #tpu.memory_space<vmem>>, vector<1x8xf32>
    %c43 = arith.constant 43 : index
    %c0_10 = arith.constant 0 : index
    %8 = vector.load %arg2[%c43, %c0_10] : memref<176x8xf32, #tpu.memory_space<vmem>>, vector<1x8xf32>
    %c0_11 = arith.constant 0 : index
    %c0_12 = arith.constant 0 : index
    %9 = vector.load %arg0[%c0_11, %c0_12] : memref<64x32xf32, #tpu.memory_space<vmem>>, vector<64x32xf32>
    %cst = arith.constant dense<0.000000e+00> : vector<64x128xf32>
    %10 = tpu.matmul %9, %0, %cst {dimension_numbers = #tpu.dot_dimension_numbers<[1], [0], [0], [1], [0, 0, 1, 1], [], []>} : vector<64x32xf32>, vector<32x128xf32>, vector<64x128xf32> -> vector<64x128xf32>
    %11 = vector.broadcast %2 : vector<1x128xf32> to vector<64x128xf32>
    %12 = arith.addf %10, %11 : vector<64x128xf32>
    %13 = vector.extract_strided_slice %4 {offsets = [0, 0], sizes = [1, 8], strides = [1, 1]} : vector<8x8xf32> to vector<1x8xf32>
    %14 = vector.shape_cast %13 : vector<1x8xf32> to vector<1x8xf32>
    %15 = vector.broadcast %14 : vector<1x8xf32> to vector<8x8xf32>
    %16 = vector.extract_strided_slice %4 {offsets = [1, 0], sizes = [1, 8], strides = [1, 1]} : vector<8x8xf32> to vector<1x8xf32>
    %17 = vector.shape_cast %16 : vector<1x8xf32> to vector<1x8xf32>
    %18 = vector.broadcast %17 : vector<1x8xf32> to vector<8x8xf32>
    %19 = vector.extract_strided_slice %4 {offsets = [2, 0], sizes = [1, 8], strides = [1, 1]} : vector<8x8xf32> to vector<1x8xf32>
    %20 = vector.shape_cast %19 : vector<1x8xf32> to vector<1x8xf32>
    %21 = vector.broadcast %20 : vector<1x8xf32> to vector<8x8xf32>
    %22 = vector.extract_strided_slice %4 {offsets = [3, 0], sizes = [1, 8], strides = [1, 1]} : vector<8x8xf32> to vector<1x8xf32>
    %23 = vector.shape_cast %22 : vector<1x8xf32> to vector<1x8xf32>
    %24 = vector.broadcast %23 : vector<1x8xf32> to vector<8x8xf32>
    %25 = vector.extract_strided_slice %4 {offsets = [4, 0], sizes = [1, 8], strides = [1, 1]} : vector<8x8xf32> to vector<1x8xf32>
    %26 = vector.shape_cast %25 : vector<1x8xf32> to vector<1x8xf32>
    %27 = vector.broadcast %26 : vector<1x8xf32> to vector<8x8xf32>
    %28 = vector.extract_strided_slice %4 {offsets = [5, 0], sizes = [1, 8], strides = [1, 1]} : vector<8x8xf32> to vector<1x8xf32>
    %29 = vector.shape_cast %28 : vector<1x8xf32> to vector<1x8xf32>
    %30 = vector.broadcast %29 : vector<1x8xf32> to vector<8x8xf32>
    %31 = vector.extract_strided_slice %4 {offsets = [6, 0], sizes = [1, 8], strides = [1, 1]} : vector<8x8xf32> to vector<1x8xf32>
    %32 = vector.shape_cast %31 : vector<1x8xf32> to vector<1x8xf32>
    %33 = vector.broadcast %32 : vector<1x8xf32> to vector<8x8xf32>
    %34 = vector.extract_strided_slice %4 {offsets = [7, 0], sizes = [1, 8], strides = [1, 1]} : vector<8x8xf32> to vector<1x8xf32>
    %35 = vector.shape_cast %34 : vector<1x8xf32> to vector<1x8xf32>
    %36 = vector.broadcast %35 : vector<1x8xf32> to vector<8x8xf32>
    %cst_13 = arith.constant 0.000000e+00 : f32
    %37 = vector.broadcast %cst_13 : f32 to vector<8x32xf32>
    %cst_14 = arith.constant 0.000000e+00 : f32
    %38 = vector.broadcast %cst_14 : f32 to vector<8x32xf32>
    %cst_15 = arith.constant 0.000000e+00 : f32
    %39 = vector.broadcast %cst_15 : f32 to vector<8x8xf32>
    %40 = vector.extract_strided_slice %12 {offsets = [0, 0], sizes = [8, 128], strides = [1, 1]} : vector<64x128xf32> to vector<8x128xf32>
    %cst_16 = arith.constant dense<0.000000e+00> : vector<8x128xf32>
    %41 = tpu.matmul %37, %1, %cst_16 {dimension_numbers = #tpu.dot_dimension_numbers<[1], [0], [0], [1], [0, 0, 1, 1], [], []>} : vector<8x32xf32>, vector<32x128xf32>, vector<8x128xf32> -> vector<8x128xf32>
    %42 = arith.addf %40, %41 : vector<8x128xf32>
    %43 = arith.negf %42 : vector<8x128xf32>
    %44 = math.exp %43 : vector<8x128xf32>
    %cst_17 = arith.constant 1.000000e+00 : f32
    %45 = vector.broadcast %cst_17 : f32 to vector<8x128xf32>
    %46 = arith.addf %45, %44 : vector<8x128xf32>
    %47 = arith.divf %45, %46 : vector<8x128xf32>
    %48 = math.tanh %42 : vector<8x128xf32>
    %49 = vector.extract_strided_slice %47 {offsets = [0, 32], sizes = [8, 32], strides = [1, 1]} : vector<8x128xf32> to vector<8x32xf32>
    %50 = arith.mulf %49, %38 : vector<8x32xf32>
    %51 = vector.extract_strided_slice %47 {offsets = [0, 0], sizes = [8, 32], strides = [1, 1]} : vector<8x128xf32> to vector<8x32xf32>
    %52 = vector.extract_strided_slice %48 {offsets = [0, 64], sizes = [8, 32], strides = [1, 1]} : vector<8x128xf32> to vector<8x32xf32>
    %53 = arith.mulf %51, %52 : vector<8x32xf32>
    %54 = arith.addf %50, %53 : vector<8x32xf32>
    %55 = vector.extract_strided_slice %47 {offsets = [0, 96], sizes = [8, 32], strides = [1, 1]} : vector<8x128xf32> to vector<8x32xf32>
    %56 = math.tanh %54 : vector<8x32xf32>
    %57 = arith.mulf %55, %56 : vector<8x32xf32>
    %cst_18 = arith.constant 0.000000e+00 : f32
    %58 = vector.broadcast %cst_18 : f32 to vector<8x32xf32>
    %59 = arith.maximumf %57, %58 : vector<8x32xf32>
    %cst_19 = arith.constant dense<0.000000e+00> : vector<8x8xf32>
    %60 = tpu.matmul %59, %3, %cst_19 {dimension_numbers = #tpu.dot_dimension_numbers<[1], [0], [0], [1], [0, 0, 1, 1], [], []>} : vector<8x32xf32>, vector<32x8xf32>, vector<8x8xf32> -> vector<8x8xf32>
    %61 = vector.broadcast %5 : vector<1x8xf32> to vector<8x8xf32>
    %62 = arith.addf %60, %61 : vector<8x8xf32>
    %c48 = arith.constant 48 : index
    %c0_20 = arith.constant 0 : index
    %63 = vector.load %arg2[%c48, %c0_20] : memref<176x8xf32, #tpu.memory_space<vmem>>, vector<8x8xf32>
    %64 = arith.mulf %62, %63 : vector<8x8xf32>
    %65 = arith.addf %39, %64 : vector<8x8xf32>
    %66 = vector.broadcast %6 : vector<1x8xf32> to vector<8x8xf32>
    %67 = arith.addf %66, %62 : vector<8x8xf32>
    %cst_21 = arith.constant dense<0xFF800000> : vector<8xf32>
    %68 = vector.multi_reduction <maximumf>, %67, %cst_21 [1] : vector<8x8xf32> to vector<8xf32>
    %69 = vector.shape_cast %68 : vector<8xf32> to vector<8x1xf32>
    %70 = vector.broadcast %69 : vector<8x1xf32> to vector<8x8xf32>
    %71 = arith.subf %67, %70 : vector<8x8xf32>
    %72 = math.exp %71 : vector<8x8xf32>
    %73 = vector.extract_strided_slice %12 {offsets = [8, 0], sizes = [8, 128], strides = [1, 1]} : vector<64x128xf32> to vector<8x128xf32>
    %cst_22 = arith.constant dense<0.000000e+00> : vector<8x128xf32>
    %74 = tpu.matmul %57, %1, %cst_22 {dimension_numbers = #tpu.dot_dimension_numbers<[1], [0], [0], [1], [0, 0, 1, 1], [], []>} : vector<8x32xf32>, vector<32x128xf32>, vector<8x128xf32> -> vector<8x128xf32>
    %75 = arith.addf %73, %74 : vector<8x128xf32>
    %76 = arith.negf %75 : vector<8x128xf32>
    %77 = math.exp %76 : vector<8x128xf32>
    %cst_23 = arith.constant 1.000000e+00 : f32
    %78 = vector.broadcast %cst_23 : f32 to vector<8x128xf32>
    %79 = arith.addf %78, %77 : vector<8x128xf32>
    %80 = arith.divf %78, %79 : vector<8x128xf32>
    %81 = math.tanh %75 : vector<8x128xf32>
    %82 = vector.extract_strided_slice %80 {offsets = [0, 32], sizes = [8, 32], strides = [1, 1]} : vector<8x128xf32> to vector<8x32xf32>
    %83 = arith.mulf %82, %54 : vector<8x32xf32>
    %84 = vector.extract_strided_slice %80 {offsets = [0, 0], sizes = [8, 32], strides = [1, 1]} : vector<8x128xf32> to vector<8x32xf32>
    %85 = vector.extract_strided_slice %81 {offsets = [0, 64], sizes = [8, 32], strides = [1, 1]} : vector<8x128xf32> to vector<8x32xf32>
    %86 = arith.mulf %84, %85 : vector<8x32xf32>
    %87 = arith.addf %83, %86 : vector<8x32xf32>
    %88 = vector.extract_strided_slice %80 {offsets = [0, 96], sizes = [8, 32], strides = [1, 1]} : vector<8x128xf32> to vector<8x32xf32>
    %89 = math.tanh %87 : vector<8x32xf32>
    %90 = arith.mulf %88, %89 : vector<8x32xf32>
    %cst_24 = arith.constant 0.000000e+00 : f32
    %91 = vector.broadcast %cst_24 : f32 to vector<8x32xf32>
    %92 = arith.maximumf %90, %91 : vector<8x32xf32>
    %cst_25 = arith.constant dense<0.000000e+00> : vector<8x8xf32>
    %93 = tpu.matmul %92, %3, %cst_25 {dimension_numbers = #tpu.dot_dimension_numbers<[1], [0], [0], [1], [0, 0, 1, 1], [], []>} : vector<8x32xf32>, vector<32x8xf32>, vector<8x8xf32> -> vector<8x8xf32>
    %94 = vector.broadcast %5 : vector<1x8xf32> to vector<8x8xf32>
    %95 = arith.addf %93, %94 : vector<8x8xf32>
    %c56 = arith.constant 56 : index
    %c0_26 = arith.constant 0 : index
    %96 = vector.load %arg2[%c56, %c0_26] : memref<176x8xf32, #tpu.memory_space<vmem>>, vector<8x8xf32>
    %97 = arith.mulf %95, %96 : vector<8x8xf32>
    %98 = arith.addf %65, %97 : vector<8x8xf32>
    %99 = vector.broadcast %8 : vector<1x8xf32> to vector<8x8xf32>
    %100 = arith.addf %95, %99 : vector<8x8xf32>
    %101 = math.exp %100 : vector<8x8xf32>
    %102 = vector.extract_strided_slice %72 {offsets = [0, 0], sizes = [8, 1], strides = [1, 1]} : vector<8x8xf32> to vector<8x1xf32>
    %103 = vector.broadcast %102 : vector<8x1xf32> to vector<8x8xf32>
    %104 = arith.mulf %103, %15 : vector<8x8xf32>
    %105 = vector.extract_strided_slice %72 {offsets = [0, 1], sizes = [8, 1], strides = [1, 1]} : vector<8x8xf32> to vector<8x1xf32>
    %106 = vector.broadcast %105 : vector<8x1xf32> to vector<8x8xf32>
    %107 = arith.mulf %106, %18 : vector<8x8xf32>
    %108 = vector.extract_strided_slice %72 {offsets = [0, 2], sizes = [8, 1], strides = [1, 1]} : vector<8x8xf32> to vector<8x1xf32>
    %109 = vector.broadcast %108 : vector<8x1xf32> to vector<8x8xf32>
    %110 = arith.mulf %109, %21 : vector<8x8xf32>
    %111 = vector.extract_strided_slice %72 {offsets = [0, 3], sizes = [8, 1], strides = [1, 1]} : vector<8x8xf32> to vector<8x1xf32>
    %112 = vector.broadcast %111 : vector<8x1xf32> to vector<8x8xf32>
    %113 = arith.mulf %112, %24 : vector<8x8xf32>
    %114 = vector.extract_strided_slice %72 {offsets = [0, 4], sizes = [8, 1], strides = [1, 1]} : vector<8x8xf32> to vector<8x1xf32>
    %115 = vector.broadcast %114 : vector<8x1xf32> to vector<8x8xf32>
    %116 = arith.mulf %115, %27 : vector<8x8xf32>
    %117 = vector.extract_strided_slice %72 {offsets = [0, 5], sizes = [8, 1], strides = [1, 1]} : vector<8x8xf32> to vector<8x1xf32>
    %118 = vector.broadcast %117 : vector<8x1xf32> to vector<8x8xf32>
    %119 = arith.mulf %118, %30 : vector<8x8xf32>
    %120 = vector.extract_strided_slice %72 {offsets = [0, 6], sizes = [8, 1], strides = [1, 1]} : vector<8x8xf32> to vector<8x1xf32>
    %121 = vector.broadcast %120 : vector<8x1xf32> to vector<8x8xf32>
    %122 = arith.mulf %121, %33 : vector<8x8xf32>
    %123 = vector.extract_strided_slice %72 {offsets = [0, 7], sizes = [8, 1], strides = [1, 1]} : vector<8x8xf32> to vector<8x1xf32>
    %124 = vector.broadcast %123 : vector<8x1xf32> to vector<8x8xf32>
    %125 = arith.mulf %124, %36 : vector<8x8xf32>
    %126 = arith.addf %104, %107 : vector<8x8xf32>
    %127 = arith.addf %110, %113 : vector<8x8xf32>
    %128 = arith.addf %116, %119 : vector<8x8xf32>
    %129 = arith.addf %122, %125 : vector<8x8xf32>
    %130 = arith.addf %126, %127 : vector<8x8xf32>
    %131 = arith.addf %128, %129 : vector<8x8xf32>
    %132 = arith.addf %130, %131 : vector<8x8xf32>
    %133 = arith.mulf %132, %101 : vector<8x8xf32>
    %c120 = arith.constant 120 : index
    %c0_27 = arith.constant 0 : index
    %134 = vector.load %arg2[%c120, %c0_27] : memref<176x8xf32, #tpu.memory_space<vmem>>, vector<8x8xf32>
    %cst_28 = arith.constant 0.000000e+00 : f32
    %135 = vector.broadcast %cst_28 : f32 to vector<8x8xf32>
    %136 = arith.cmpf ogt, %134, %135 : vector<8x8xf32>
    %137 = arith.select %136, %133, %72 : vector<8x8xi1>, vector<8x8xf32>
    %138 = vector.extract_strided_slice %12 {offsets = [16, 0], sizes = [8, 128], strides = [1, 1]} : vector<64x128xf32> to vector<8x128xf32>
    %cst_29 = arith.constant dense<0.000000e+00> : vector<8x128xf32>
    %139 = tpu.matmul %90, %1, %cst_29 {dimension_numbers = #tpu.dot_dimension_numbers<[1], [0], [0], [1], [0, 0, 1, 1], [], []>} : vector<8x32xf32>, vector<32x128xf32>, vector<8x128xf32> -> vector<8x128xf32>
    %140 = arith.addf %138, %139 : vector<8x128xf32>
    %141 = arith.negf %140 : vector<8x128xf32>
    %142 = math.exp %141 : vector<8x128xf32>
    %cst_30 = arith.constant 1.000000e+00 : f32
    %143 = vector.broadcast %cst_30 : f32 to vector<8x128xf32>
    %144 = arith.addf %143, %142 : vector<8x128xf32>
    %145 = arith.divf %143, %144 : vector<8x128xf32>
    %146 = math.tanh %140 : vector<8x128xf32>
    %147 = vector.extract_strided_slice %145 {offsets = [0, 32], sizes = [8, 32], strides = [1, 1]} : vector<8x128xf32> to vector<8x32xf32>
    %148 = arith.mulf %147, %87 : vector<8x32xf32>
    %149 = vector.extract_strided_slice %145 {offsets = [0, 0], sizes = [8, 32], strides = [1, 1]} : vector<8x128xf32> to vector<8x32xf32>
    %150 = vector.extract_strided_slice %146 {offsets = [0, 64], sizes = [8, 32], strides = [1, 1]} : vector<8x128xf32> to vector<8x32xf32>
    %151 = arith.mulf %149, %150 : vector<8x32xf32>
    %152 = arith.addf %148, %151 : vector<8x32xf32>
    %153 = vector.extract_strided_slice %145 {offsets = [0, 96], sizes = [8, 32], strides = [1, 1]} : vector<8x128xf32> to vector<8x32xf32>
    %154 = math.tanh %152 : vector<8x32xf32>
    %155 = arith.mulf %153, %154 : vector<8x32xf32>
    %cst_31 = arith.constant 0.000000e+00 : f32
    %156 = vector.broadcast %cst_31 : f32 to vector<8x32xf32>
    %157 = arith.maximumf %155, %156 : vector<8x32xf32>
    %cst_32 = arith.constant dense<0.000000e+00> : vector<8x8xf32>
    %158 = tpu.matmul %157, %3, %cst_32 {dimension_numbers = #tpu.dot_dimension_numbers<[1], [0], [0], [1], [0, 0, 1, 1], [], []>} : vector<8x32xf32>, vector<32x8xf32>, vector<8x8xf32> -> vector<8x8xf32>
    %159 = vector.broadcast %5 : vector<1x8xf32> to vector<8x8xf32>
    %160 = arith.addf %158, %159 : vector<8x8xf32>
    %c64_33 = arith.constant 64 : index
    %c0_34 = arith.constant 0 : index
    %161 = vector.load %arg2[%c64_33, %c0_34] : memref<176x8xf32, #tpu.memory_space<vmem>>, vector<8x8xf32>
    %162 = arith.mulf %160, %161 : vector<8x8xf32>
    %163 = arith.addf %98, %162 : vector<8x8xf32>
    %164 = vector.broadcast %8 : vector<1x8xf32> to vector<8x8xf32>
    %165 = arith.addf %160, %164 : vector<8x8xf32>
    %166 = math.exp %165 : vector<8x8xf32>
    %167 = vector.extract_strided_slice %137 {offsets = [0, 0], sizes = [8, 1], strides = [1, 1]} : vector<8x8xf32> to vector<8x1xf32>
    %168 = vector.broadcast %167 : vector<8x1xf32> to vector<8x8xf32>
    %169 = arith.mulf %168, %15 : vector<8x8xf32>
    %170 = vector.extract_strided_slice %137 {offsets = [0, 1], sizes = [8, 1], strides = [1, 1]} : vector<8x8xf32> to vector<8x1xf32>
    %171 = vector.broadcast %170 : vector<8x1xf32> to vector<8x8xf32>
    %172 = arith.mulf %171, %18 : vector<8x8xf32>
    %173 = vector.extract_strided_slice %137 {offsets = [0, 2], sizes = [8, 1], strides = [1, 1]} : vector<8x8xf32> to vector<8x1xf32>
    %174 = vector.broadcast %173 : vector<8x1xf32> to vector<8x8xf32>
    %175 = arith.mulf %174, %21 : vector<8x8xf32>
    %176 = vector.extract_strided_slice %137 {offsets = [0, 3], sizes = [8, 1], strides = [1, 1]} : vector<8x8xf32> to vector<8x1xf32>
    %177 = vector.broadcast %176 : vector<8x1xf32> to vector<8x8xf32>
    %178 = arith.mulf %177, %24 : vector<8x8xf32>
    %179 = vector.extract_strided_slice %137 {offsets = [0, 4], sizes = [8, 1], strides = [1, 1]} : vector<8x8xf32> to vector<8x1xf32>
    %180 = vector.broadcast %179 : vector<8x1xf32> to vector<8x8xf32>
    %181 = arith.mulf %180, %27 : vector<8x8xf32>
    %182 = vector.extract_strided_slice %137 {offsets = [0, 5], sizes = [8, 1], strides = [1, 1]} : vector<8x8xf32> to vector<8x1xf32>
    %183 = vector.broadcast %182 : vector<8x1xf32> to vector<8x8xf32>
    %184 = arith.mulf %183, %30 : vector<8x8xf32>
    %185 = vector.extract_strided_slice %137 {offsets = [0, 6], sizes = [8, 1], strides = [1, 1]} : vector<8x8xf32> to vector<8x1xf32>
    %186 = vector.broadcast %185 : vector<8x1xf32> to vector<8x8xf32>
    %187 = arith.mulf %186, %33 : vector<8x8xf32>
    %188 = vector.extract_strided_slice %137 {offsets = [0, 7], sizes = [8, 1], strides = [1, 1]} : vector<8x8xf32> to vector<8x1xf32>
    %189 = vector.broadcast %188 : vector<8x1xf32> to vector<8x8xf32>
    %190 = arith.mulf %189, %36 : vector<8x8xf32>
    %191 = arith.addf %169, %172 : vector<8x8xf32>
    %192 = arith.addf %175, %178 : vector<8x8xf32>
    %193 = arith.addf %181, %184 : vector<8x8xf32>
    %194 = arith.addf %187, %190 : vector<8x8xf32>
    %195 = arith.addf %191, %192 : vector<8x8xf32>
    %196 = arith.addf %193, %194 : vector<8x8xf32>
    %197 = arith.addf %195, %196 : vector<8x8xf32>
    %198 = arith.mulf %197, %166 : vector<8x8xf32>
    %c128 = arith.constant 128 : index
    %c0_35 = arith.constant 0 : index
    %199 = vector.load %arg2[%c128, %c0_35] : memref<176x8xf32, #tpu.memory_space<vmem>>, vector<8x8xf32>
    %cst_36 = arith.constant 0.000000e+00 : f32
    %200 = vector.broadcast %cst_36 : f32 to vector<8x8xf32>
    %201 = arith.cmpf ogt, %199, %200 : vector<8x8xf32>
    %202 = arith.select %201, %198, %137 : vector<8x8xi1>, vector<8x8xf32>
    %203 = vector.extract_strided_slice %12 {offsets = [24, 0], sizes = [8, 128], strides = [1, 1]} : vector<64x128xf32> to vector<8x128xf32>
    %cst_37 = arith.constant dense<0.000000e+00> : vector<8x128xf32>
    %204 = tpu.matmul %155, %1, %cst_37 {dimension_numbers = #tpu.dot_dimension_numbers<[1], [0], [0], [1], [0, 0, 1, 1], [], []>} : vector<8x32xf32>, vector<32x128xf32>, vector<8x128xf32> -> vector<8x128xf32>
    %205 = arith.addf %203, %204 : vector<8x128xf32>
    %206 = arith.negf %205 : vector<8x128xf32>
    %207 = math.exp %206 : vector<8x128xf32>
    %cst_38 = arith.constant 1.000000e+00 : f32
    %208 = vector.broadcast %cst_38 : f32 to vector<8x128xf32>
    %209 = arith.addf %208, %207 : vector<8x128xf32>
    %210 = arith.divf %208, %209 : vector<8x128xf32>
    %211 = math.tanh %205 : vector<8x128xf32>
    %212 = vector.extract_strided_slice %210 {offsets = [0, 32], sizes = [8, 32], strides = [1, 1]} : vector<8x128xf32> to vector<8x32xf32>
    %213 = arith.mulf %212, %152 : vector<8x32xf32>
    %214 = vector.extract_strided_slice %210 {offsets = [0, 0], sizes = [8, 32], strides = [1, 1]} : vector<8x128xf32> to vector<8x32xf32>
    %215 = vector.extract_strided_slice %211 {offsets = [0, 64], sizes = [8, 32], strides = [1, 1]} : vector<8x128xf32> to vector<8x32xf32>
    %216 = arith.mulf %214, %215 : vector<8x32xf32>
    %217 = arith.addf %213, %216 : vector<8x32xf32>
    %218 = vector.extract_strided_slice %210 {offsets = [0, 96], sizes = [8, 32], strides = [1, 1]} : vector<8x128xf32> to vector<8x32xf32>
    %219 = math.tanh %217 : vector<8x32xf32>
    %220 = arith.mulf %218, %219 : vector<8x32xf32>
    %cst_39 = arith.constant 0.000000e+00 : f32
    %221 = vector.broadcast %cst_39 : f32 to vector<8x32xf32>
    %222 = arith.maximumf %220, %221 : vector<8x32xf32>
    %cst_40 = arith.constant dense<0.000000e+00> : vector<8x8xf32>
    %223 = tpu.matmul %222, %3, %cst_40 {dimension_numbers = #tpu.dot_dimension_numbers<[1], [0], [0], [1], [0, 0, 1, 1], [], []>} : vector<8x32xf32>, vector<32x8xf32>, vector<8x8xf32> -> vector<8x8xf32>
    %224 = vector.broadcast %5 : vector<1x8xf32> to vector<8x8xf32>
    %225 = arith.addf %223, %224 : vector<8x8xf32>
    %c72 = arith.constant 72 : index
    %c0_41 = arith.constant 0 : index
    %226 = vector.load %arg2[%c72, %c0_41] : memref<176x8xf32, #tpu.memory_space<vmem>>, vector<8x8xf32>
    %227 = arith.mulf %225, %226 : vector<8x8xf32>
    %228 = arith.addf %163, %227 : vector<8x8xf32>
    %229 = vector.broadcast %8 : vector<1x8xf32> to vector<8x8xf32>
    %230 = arith.addf %225, %229 : vector<8x8xf32>
    %231 = math.exp %230 : vector<8x8xf32>
    %232 = vector.extract_strided_slice %202 {offsets = [0, 0], sizes = [8, 1], strides = [1, 1]} : vector<8x8xf32> to vector<8x1xf32>
    %233 = vector.broadcast %232 : vector<8x1xf32> to vector<8x8xf32>
    %234 = arith.mulf %233, %15 : vector<8x8xf32>
    %235 = vector.extract_strided_slice %202 {offsets = [0, 1], sizes = [8, 1], strides = [1, 1]} : vector<8x8xf32> to vector<8x1xf32>
    %236 = vector.broadcast %235 : vector<8x1xf32> to vector<8x8xf32>
    %237 = arith.mulf %236, %18 : vector<8x8xf32>
    %238 = vector.extract_strided_slice %202 {offsets = [0, 2], sizes = [8, 1], strides = [1, 1]} : vector<8x8xf32> to vector<8x1xf32>
    %239 = vector.broadcast %238 : vector<8x1xf32> to vector<8x8xf32>
    %240 = arith.mulf %239, %21 : vector<8x8xf32>
    %241 = vector.extract_strided_slice %202 {offsets = [0, 3], sizes = [8, 1], strides = [1, 1]} : vector<8x8xf32> to vector<8x1xf32>
    %242 = vector.broadcast %241 : vector<8x1xf32> to vector<8x8xf32>
    %243 = arith.mulf %242, %24 : vector<8x8xf32>
    %244 = vector.extract_strided_slice %202 {offsets = [0, 4], sizes = [8, 1], strides = [1, 1]} : vector<8x8xf32> to vector<8x1xf32>
    %245 = vector.broadcast %244 : vector<8x1xf32> to vector<8x8xf32>
    %246 = arith.mulf %245, %27 : vector<8x8xf32>
    %247 = vector.extract_strided_slice %202 {offsets = [0, 5], sizes = [8, 1], strides = [1, 1]} : vector<8x8xf32> to vector<8x1xf32>
    %248 = vector.broadcast %247 : vector<8x1xf32> to vector<8x8xf32>
    %249 = arith.mulf %248, %30 : vector<8x8xf32>
    %250 = vector.extract_strided_slice %202 {offsets = [0, 6], sizes = [8, 1], strides = [1, 1]} : vector<8x8xf32> to vector<8x1xf32>
    %251 = vector.broadcast %250 : vector<8x1xf32> to vector<8x8xf32>
    %252 = arith.mulf %251, %33 : vector<8x8xf32>
    %253 = vector.extract_strided_slice %202 {offsets = [0, 7], sizes = [8, 1], strides = [1, 1]} : vector<8x8xf32> to vector<8x1xf32>
    %254 = vector.broadcast %253 : vector<8x1xf32> to vector<8x8xf32>
    %255 = arith.mulf %254, %36 : vector<8x8xf32>
    %256 = arith.addf %234, %237 : vector<8x8xf32>
    %257 = arith.addf %240, %243 : vector<8x8xf32>
    %258 = arith.addf %246, %249 : vector<8x8xf32>
    %259 = arith.addf %252, %255 : vector<8x8xf32>
    %260 = arith.addf %256, %257 : vector<8x8xf32>
    %261 = arith.addf %258, %259 : vector<8x8xf32>
    %262 = arith.addf %260, %261 : vector<8x8xf32>
    %263 = arith.mulf %262, %231 : vector<8x8xf32>
    %c136 = arith.constant 136 : index
    %c0_42 = arith.constant 0 : index
    %264 = vector.load %arg2[%c136, %c0_42] : memref<176x8xf32, #tpu.memory_space<vmem>>, vector<8x8xf32>
    %cst_43 = arith.constant 0.000000e+00 : f32
    %265 = vector.broadcast %cst_43 : f32 to vector<8x8xf32>
    %266 = arith.cmpf ogt, %264, %265 : vector<8x8xf32>
    %267 = arith.select %266, %263, %202 : vector<8x8xi1>, vector<8x8xf32>
    %268 = vector.extract_strided_slice %12 {offsets = [32, 0], sizes = [8, 128], strides = [1, 1]} : vector<64x128xf32> to vector<8x128xf32>
    %cst_44 = arith.constant dense<0.000000e+00> : vector<8x128xf32>
    %269 = tpu.matmul %220, %1, %cst_44 {dimension_numbers = #tpu.dot_dimension_numbers<[1], [0], [0], [1], [0, 0, 1, 1], [], []>} : vector<8x32xf32>, vector<32x128xf32>, vector<8x128xf32> -> vector<8x128xf32>
    %270 = arith.addf %268, %269 : vector<8x128xf32>
    %271 = arith.negf %270 : vector<8x128xf32>
    %272 = math.exp %271 : vector<8x128xf32>
    %cst_45 = arith.constant 1.000000e+00 : f32
    %273 = vector.broadcast %cst_45 : f32 to vector<8x128xf32>
    %274 = arith.addf %273, %272 : vector<8x128xf32>
    %275 = arith.divf %273, %274 : vector<8x128xf32>
    %276 = math.tanh %270 : vector<8x128xf32>
    %277 = vector.extract_strided_slice %275 {offsets = [0, 32], sizes = [8, 32], strides = [1, 1]} : vector<8x128xf32> to vector<8x32xf32>
    %278 = arith.mulf %277, %217 : vector<8x32xf32>
    %279 = vector.extract_strided_slice %275 {offsets = [0, 0], sizes = [8, 32], strides = [1, 1]} : vector<8x128xf32> to vector<8x32xf32>
    %280 = vector.extract_strided_slice %276 {offsets = [0, 64], sizes = [8, 32], strides = [1, 1]} : vector<8x128xf32> to vector<8x32xf32>
    %281 = arith.mulf %279, %280 : vector<8x32xf32>
    %282 = arith.addf %278, %281 : vector<8x32xf32>
    %283 = vector.extract_strided_slice %275 {offsets = [0, 96], sizes = [8, 32], strides = [1, 1]} : vector<8x128xf32> to vector<8x32xf32>
    %284 = math.tanh %282 : vector<8x32xf32>
    %285 = arith.mulf %283, %284 : vector<8x32xf32>
    %cst_46 = arith.constant 0.000000e+00 : f32
    %286 = vector.broadcast %cst_46 : f32 to vector<8x32xf32>
    %287 = arith.maximumf %285, %286 : vector<8x32xf32>
    %cst_47 = arith.constant dense<0.000000e+00> : vector<8x8xf32>
    %288 = tpu.matmul %287, %3, %cst_47 {dimension_numbers = #tpu.dot_dimension_numbers<[1], [0], [0], [1], [0, 0, 1, 1], [], []>} : vector<8x32xf32>, vector<32x8xf32>, vector<8x8xf32> -> vector<8x8xf32>
    %289 = vector.broadcast %5 : vector<1x8xf32> to vector<8x8xf32>
    %290 = arith.addf %288, %289 : vector<8x8xf32>
    %c80 = arith.constant 80 : index
    %c0_48 = arith.constant 0 : index
    %291 = vector.load %arg2[%c80, %c0_48] : memref<176x8xf32, #tpu.memory_space<vmem>>, vector<8x8xf32>
    %292 = arith.mulf %290, %291 : vector<8x8xf32>
    %293 = arith.addf %228, %292 : vector<8x8xf32>
    %294 = vector.broadcast %8 : vector<1x8xf32> to vector<8x8xf32>
    %295 = arith.addf %290, %294 : vector<8x8xf32>
    %296 = math.exp %295 : vector<8x8xf32>
    %297 = vector.extract_strided_slice %267 {offsets = [0, 0], sizes = [8, 1], strides = [1, 1]} : vector<8x8xf32> to vector<8x1xf32>
    %298 = vector.broadcast %297 : vector<8x1xf32> to vector<8x8xf32>
    %299 = arith.mulf %298, %15 : vector<8x8xf32>
    %300 = vector.extract_strided_slice %267 {offsets = [0, 1], sizes = [8, 1], strides = [1, 1]} : vector<8x8xf32> to vector<8x1xf32>
    %301 = vector.broadcast %300 : vector<8x1xf32> to vector<8x8xf32>
    %302 = arith.mulf %301, %18 : vector<8x8xf32>
    %303 = vector.extract_strided_slice %267 {offsets = [0, 2], sizes = [8, 1], strides = [1, 1]} : vector<8x8xf32> to vector<8x1xf32>
    %304 = vector.broadcast %303 : vector<8x1xf32> to vector<8x8xf32>
    %305 = arith.mulf %304, %21 : vector<8x8xf32>
    %306 = vector.extract_strided_slice %267 {offsets = [0, 3], sizes = [8, 1], strides = [1, 1]} : vector<8x8xf32> to vector<8x1xf32>
    %307 = vector.broadcast %306 : vector<8x1xf32> to vector<8x8xf32>
    %308 = arith.mulf %307, %24 : vector<8x8xf32>
    %309 = vector.extract_strided_slice %267 {offsets = [0, 4], sizes = [8, 1], strides = [1, 1]} : vector<8x8xf32> to vector<8x1xf32>
    %310 = vector.broadcast %309 : vector<8x1xf32> to vector<8x8xf32>
    %311 = arith.mulf %310, %27 : vector<8x8xf32>
    %312 = vector.extract_strided_slice %267 {offsets = [0, 5], sizes = [8, 1], strides = [1, 1]} : vector<8x8xf32> to vector<8x1xf32>
    %313 = vector.broadcast %312 : vector<8x1xf32> to vector<8x8xf32>
    %314 = arith.mulf %313, %30 : vector<8x8xf32>
    %315 = vector.extract_strided_slice %267 {offsets = [0, 6], sizes = [8, 1], strides = [1, 1]} : vector<8x8xf32> to vector<8x1xf32>
    %316 = vector.broadcast %315 : vector<8x1xf32> to vector<8x8xf32>
    %317 = arith.mulf %316, %33 : vector<8x8xf32>
    %318 = vector.extract_strided_slice %267 {offsets = [0, 7], sizes = [8, 1], strides = [1, 1]} : vector<8x8xf32> to vector<8x1xf32>
    %319 = vector.broadcast %318 : vector<8x1xf32> to vector<8x8xf32>
    %320 = arith.mulf %319, %36 : vector<8x8xf32>
    %321 = arith.addf %299, %302 : vector<8x8xf32>
    %322 = arith.addf %305, %308 : vector<8x8xf32>
    %323 = arith.addf %311, %314 : vector<8x8xf32>
    %324 = arith.addf %317, %320 : vector<8x8xf32>
    %325 = arith.addf %321, %322 : vector<8x8xf32>
    %326 = arith.addf %323, %324 : vector<8x8xf32>
    %327 = arith.addf %325, %326 : vector<8x8xf32>
    %328 = arith.mulf %327, %296 : vector<8x8xf32>
    %c144 = arith.constant 144 : index
    %c0_49 = arith.constant 0 : index
    %329 = vector.load %arg2[%c144, %c0_49] : memref<176x8xf32, #tpu.memory_space<vmem>>, vector<8x8xf32>
    %cst_50 = arith.constant 0.000000e+00 : f32
    %330 = vector.broadcast %cst_50 : f32 to vector<8x8xf32>
    %331 = arith.cmpf ogt, %329, %330 : vector<8x8xf32>
    %332 = arith.select %331, %328, %267 : vector<8x8xi1>, vector<8x8xf32>
    %333 = vector.extract_strided_slice %12 {offsets = [40, 0], sizes = [8, 128], strides = [1, 1]} : vector<64x128xf32> to vector<8x128xf32>
    %cst_51 = arith.constant dense<0.000000e+00> : vector<8x128xf32>
    %334 = tpu.matmul %285, %1, %cst_51 {dimension_numbers = #tpu.dot_dimension_numbers<[1], [0], [0], [1], [0, 0, 1, 1], [], []>} : vector<8x32xf32>, vector<32x128xf32>, vector<8x128xf32> -> vector<8x128xf32>
    %335 = arith.addf %333, %334 : vector<8x128xf32>
    %336 = arith.negf %335 : vector<8x128xf32>
    %337 = math.exp %336 : vector<8x128xf32>
    %cst_52 = arith.constant 1.000000e+00 : f32
    %338 = vector.broadcast %cst_52 : f32 to vector<8x128xf32>
    %339 = arith.addf %338, %337 : vector<8x128xf32>
    %340 = arith.divf %338, %339 : vector<8x128xf32>
    %341 = math.tanh %335 : vector<8x128xf32>
    %342 = vector.extract_strided_slice %340 {offsets = [0, 32], sizes = [8, 32], strides = [1, 1]} : vector<8x128xf32> to vector<8x32xf32>
    %343 = arith.mulf %342, %282 : vector<8x32xf32>
    %344 = vector.extract_strided_slice %340 {offsets = [0, 0], sizes = [8, 32], strides = [1, 1]} : vector<8x128xf32> to vector<8x32xf32>
    %345 = vector.extract_strided_slice %341 {offsets = [0, 64], sizes = [8, 32], strides = [1, 1]} : vector<8x128xf32> to vector<8x32xf32>
    %346 = arith.mulf %344, %345 : vector<8x32xf32>
    %347 = arith.addf %343, %346 : vector<8x32xf32>
    %348 = vector.extract_strided_slice %340 {offsets = [0, 96], sizes = [8, 32], strides = [1, 1]} : vector<8x128xf32> to vector<8x32xf32>
    %349 = math.tanh %347 : vector<8x32xf32>
    %350 = arith.mulf %348, %349 : vector<8x32xf32>
    %cst_53 = arith.constant 0.000000e+00 : f32
    %351 = vector.broadcast %cst_53 : f32 to vector<8x32xf32>
    %352 = arith.maximumf %350, %351 : vector<8x32xf32>
    %cst_54 = arith.constant dense<0.000000e+00> : vector<8x8xf32>
    %353 = tpu.matmul %352, %3, %cst_54 {dimension_numbers = #tpu.dot_dimension_numbers<[1], [0], [0], [1], [0, 0, 1, 1], [], []>} : vector<8x32xf32>, vector<32x8xf32>, vector<8x8xf32> -> vector<8x8xf32>
    %354 = vector.broadcast %5 : vector<1x8xf32> to vector<8x8xf32>
    %355 = arith.addf %353, %354 : vector<8x8xf32>
    %c88 = arith.constant 88 : index
    %c0_55 = arith.constant 0 : index
    %356 = vector.load %arg2[%c88, %c0_55] : memref<176x8xf32, #tpu.memory_space<vmem>>, vector<8x8xf32>
    %357 = arith.mulf %355, %356 : vector<8x8xf32>
    %358 = arith.addf %293, %357 : vector<8x8xf32>
    %359 = vector.broadcast %8 : vector<1x8xf32> to vector<8x8xf32>
    %360 = arith.addf %355, %359 : vector<8x8xf32>
    %361 = math.exp %360 : vector<8x8xf32>
    %362 = vector.extract_strided_slice %332 {offsets = [0, 0], sizes = [8, 1], strides = [1, 1]} : vector<8x8xf32> to vector<8x1xf32>
    %363 = vector.broadcast %362 : vector<8x1xf32> to vector<8x8xf32>
    %364 = arith.mulf %363, %15 : vector<8x8xf32>
    %365 = vector.extract_strided_slice %332 {offsets = [0, 1], sizes = [8, 1], strides = [1, 1]} : vector<8x8xf32> to vector<8x1xf32>
    %366 = vector.broadcast %365 : vector<8x1xf32> to vector<8x8xf32>
    %367 = arith.mulf %366, %18 : vector<8x8xf32>
    %368 = vector.extract_strided_slice %332 {offsets = [0, 2], sizes = [8, 1], strides = [1, 1]} : vector<8x8xf32> to vector<8x1xf32>
    %369 = vector.broadcast %368 : vector<8x1xf32> to vector<8x8xf32>
    %370 = arith.mulf %369, %21 : vector<8x8xf32>
    %371 = vector.extract_strided_slice %332 {offsets = [0, 3], sizes = [8, 1], strides = [1, 1]} : vector<8x8xf32> to vector<8x1xf32>
    %372 = vector.broadcast %371 : vector<8x1xf32> to vector<8x8xf32>
    %373 = arith.mulf %372, %24 : vector<8x8xf32>
    %374 = vector.extract_strided_slice %332 {offsets = [0, 4], sizes = [8, 1], strides = [1, 1]} : vector<8x8xf32> to vector<8x1xf32>
    %375 = vector.broadcast %374 : vector<8x1xf32> to vector<8x8xf32>
    %376 = arith.mulf %375, %27 : vector<8x8xf32>
    %377 = vector.extract_strided_slice %332 {offsets = [0, 5], sizes = [8, 1], strides = [1, 1]} : vector<8x8xf32> to vector<8x1xf32>
    %378 = vector.broadcast %377 : vector<8x1xf32> to vector<8x8xf32>
    %379 = arith.mulf %378, %30 : vector<8x8xf32>
    %380 = vector.extract_strided_slice %332 {offsets = [0, 6], sizes = [8, 1], strides = [1, 1]} : vector<8x8xf32> to vector<8x1xf32>
    %381 = vector.broadcast %380 : vector<8x1xf32> to vector<8x8xf32>
    %382 = arith.mulf %381, %33 : vector<8x8xf32>
    %383 = vector.extract_strided_slice %332 {offsets = [0, 7], sizes = [8, 1], strides = [1, 1]} : vector<8x8xf32> to vector<8x1xf32>
    %384 = vector.broadcast %383 : vector<8x1xf32> to vector<8x8xf32>
    %385 = arith.mulf %384, %36 : vector<8x8xf32>
    %386 = arith.addf %364, %367 : vector<8x8xf32>
    %387 = arith.addf %370, %373 : vector<8x8xf32>
    %388 = arith.addf %376, %379 : vector<8x8xf32>
    %389 = arith.addf %382, %385 : vector<8x8xf32>
    %390 = arith.addf %386, %387 : vector<8x8xf32>
    %391 = arith.addf %388, %389 : vector<8x8xf32>
    %392 = arith.addf %390, %391 : vector<8x8xf32>
    %393 = arith.mulf %392, %361 : vector<8x8xf32>
    %c152 = arith.constant 152 : index
    %c0_56 = arith.constant 0 : index
    %394 = vector.load %arg2[%c152, %c0_56] : memref<176x8xf32, #tpu.memory_space<vmem>>, vector<8x8xf32>
    %cst_57 = arith.constant 0.000000e+00 : f32
    %395 = vector.broadcast %cst_57 : f32 to vector<8x8xf32>
    %396 = arith.cmpf ogt, %394, %395 : vector<8x8xf32>
    %397 = arith.select %396, %393, %332 : vector<8x8xi1>, vector<8x8xf32>
    %398 = vector.extract_strided_slice %12 {offsets = [48, 0], sizes = [8, 128], strides = [1, 1]} : vector<64x128xf32> to vector<8x128xf32>
    %cst_58 = arith.constant dense<0.000000e+00> : vector<8x128xf32>
    %399 = tpu.matmul %350, %1, %cst_58 {dimension_numbers = #tpu.dot_dimension_numbers<[1], [0], [0], [1], [0, 0, 1, 1], [], []>} : vector<8x32xf32>, vector<32x128xf32>, vector<8x128xf32> -> vector<8x128xf32>
    %400 = arith.addf %398, %399 : vector<8x128xf32>
    %401 = arith.negf %400 : vector<8x128xf32>
    %402 = math.exp %401 : vector<8x128xf32>
    %cst_59 = arith.constant 1.000000e+00 : f32
    %403 = vector.broadcast %cst_59 : f32 to vector<8x128xf32>
    %404 = arith.addf %403, %402 : vector<8x128xf32>
    %405 = arith.divf %403, %404 : vector<8x128xf32>
    %406 = math.tanh %400 : vector<8x128xf32>
    %407 = vector.extract_strided_slice %405 {offsets = [0, 32], sizes = [8, 32], strides = [1, 1]} : vector<8x128xf32> to vector<8x32xf32>
    %408 = arith.mulf %407, %347 : vector<8x32xf32>
    %409 = vector.extract_strided_slice %405 {offsets = [0, 0], sizes = [8, 32], strides = [1, 1]} : vector<8x128xf32> to vector<8x32xf32>
    %410 = vector.extract_strided_slice %406 {offsets = [0, 64], sizes = [8, 32], strides = [1, 1]} : vector<8x128xf32> to vector<8x32xf32>
    %411 = arith.mulf %409, %410 : vector<8x32xf32>
    %412 = arith.addf %408, %411 : vector<8x32xf32>
    %413 = vector.extract_strided_slice %405 {offsets = [0, 96], sizes = [8, 32], strides = [1, 1]} : vector<8x128xf32> to vector<8x32xf32>
    %414 = math.tanh %412 : vector<8x32xf32>
    %415 = arith.mulf %413, %414 : vector<8x32xf32>
    %cst_60 = arith.constant 0.000000e+00 : f32
    %416 = vector.broadcast %cst_60 : f32 to vector<8x32xf32>
    %417 = arith.maximumf %415, %416 : vector<8x32xf32>
    %cst_61 = arith.constant dense<0.000000e+00> : vector<8x8xf32>
    %418 = tpu.matmul %417, %3, %cst_61 {dimension_numbers = #tpu.dot_dimension_numbers<[1], [0], [0], [1], [0, 0, 1, 1], [], []>} : vector<8x32xf32>, vector<32x8xf32>, vector<8x8xf32> -> vector<8x8xf32>
    %419 = vector.broadcast %5 : vector<1x8xf32> to vector<8x8xf32>
    %420 = arith.addf %418, %419 : vector<8x8xf32>
    %c96 = arith.constant 96 : index
    %c0_62 = arith.constant 0 : index
    %421 = vector.load %arg2[%c96, %c0_62] : memref<176x8xf32, #tpu.memory_space<vmem>>, vector<8x8xf32>
    %422 = arith.mulf %420, %421 : vector<8x8xf32>
    %423 = arith.addf %358, %422 : vector<8x8xf32>
    %424 = vector.broadcast %8 : vector<1x8xf32> to vector<8x8xf32>
    %425 = arith.addf %420, %424 : vector<8x8xf32>
    %426 = math.exp %425 : vector<8x8xf32>
    %427 = vector.extract_strided_slice %397 {offsets = [0, 0], sizes = [8, 1], strides = [1, 1]} : vector<8x8xf32> to vector<8x1xf32>
    %428 = vector.broadcast %427 : vector<8x1xf32> to vector<8x8xf32>
    %429 = arith.mulf %428, %15 : vector<8x8xf32>
    %430 = vector.extract_strided_slice %397 {offsets = [0, 1], sizes = [8, 1], strides = [1, 1]} : vector<8x8xf32> to vector<8x1xf32>
    %431 = vector.broadcast %430 : vector<8x1xf32> to vector<8x8xf32>
    %432 = arith.mulf %431, %18 : vector<8x8xf32>
    %433 = vector.extract_strided_slice %397 {offsets = [0, 2], sizes = [8, 1], strides = [1, 1]} : vector<8x8xf32> to vector<8x1xf32>
    %434 = vector.broadcast %433 : vector<8x1xf32> to vector<8x8xf32>
    %435 = arith.mulf %434, %21 : vector<8x8xf32>
    %436 = vector.extract_strided_slice %397 {offsets = [0, 3], sizes = [8, 1], strides = [1, 1]} : vector<8x8xf32> to vector<8x1xf32>
    %437 = vector.broadcast %436 : vector<8x1xf32> to vector<8x8xf32>
    %438 = arith.mulf %437, %24 : vector<8x8xf32>
    %439 = vector.extract_strided_slice %397 {offsets = [0, 4], sizes = [8, 1], strides = [1, 1]} : vector<8x8xf32> to vector<8x1xf32>
    %440 = vector.broadcast %439 : vector<8x1xf32> to vector<8x8xf32>
    %441 = arith.mulf %440, %27 : vector<8x8xf32>
    %442 = vector.extract_strided_slice %397 {offsets = [0, 5], sizes = [8, 1], strides = [1, 1]} : vector<8x8xf32> to vector<8x1xf32>
    %443 = vector.broadcast %442 : vector<8x1xf32> to vector<8x8xf32>
    %444 = arith.mulf %443, %30 : vector<8x8xf32>
    %445 = vector.extract_strided_slice %397 {offsets = [0, 6], sizes = [8, 1], strides = [1, 1]} : vector<8x8xf32> to vector<8x1xf32>
    %446 = vector.broadcast %445 : vector<8x1xf32> to vector<8x8xf32>
    %447 = arith.mulf %446, %33 : vector<8x8xf32>
    %448 = vector.extract_strided_slice %397 {offsets = [0, 7], sizes = [8, 1], strides = [1, 1]} : vector<8x8xf32> to vector<8x1xf32>
    %449 = vector.broadcast %448 : vector<8x1xf32> to vector<8x8xf32>
    %450 = arith.mulf %449, %36 : vector<8x8xf32>
    %451 = arith.addf %429, %432 : vector<8x8xf32>
    %452 = arith.addf %435, %438 : vector<8x8xf32>
    %453 = arith.addf %441, %444 : vector<8x8xf32>
    %454 = arith.addf %447, %450 : vector<8x8xf32>
    %455 = arith.addf %451, %452 : vector<8x8xf32>
    %456 = arith.addf %453, %454 : vector<8x8xf32>
    %457 = arith.addf %455, %456 : vector<8x8xf32>
    %458 = arith.mulf %457, %426 : vector<8x8xf32>
    %c160 = arith.constant 160 : index
    %c0_63 = arith.constant 0 : index
    %459 = vector.load %arg2[%c160, %c0_63] : memref<176x8xf32, #tpu.memory_space<vmem>>, vector<8x8xf32>
    %cst_64 = arith.constant 0.000000e+00 : f32
    %460 = vector.broadcast %cst_64 : f32 to vector<8x8xf32>
    %461 = arith.cmpf ogt, %459, %460 : vector<8x8xf32>
    %462 = arith.select %461, %458, %397 : vector<8x8xi1>, vector<8x8xf32>
    %463 = vector.extract_strided_slice %12 {offsets = [56, 0], sizes = [8, 128], strides = [1, 1]} : vector<64x128xf32> to vector<8x128xf32>
    %cst_65 = arith.constant dense<0.000000e+00> : vector<8x128xf32>
    %464 = tpu.matmul %415, %1, %cst_65 {dimension_numbers = #tpu.dot_dimension_numbers<[1], [0], [0], [1], [0, 0, 1, 1], [], []>} : vector<8x32xf32>, vector<32x128xf32>, vector<8x128xf32> -> vector<8x128xf32>
    %465 = arith.addf %463, %464 : vector<8x128xf32>
    %466 = arith.negf %465 : vector<8x128xf32>
    %467 = math.exp %466 : vector<8x128xf32>
    %cst_66 = arith.constant 1.000000e+00 : f32
    %468 = vector.broadcast %cst_66 : f32 to vector<8x128xf32>
    %469 = arith.addf %468, %467 : vector<8x128xf32>
    %470 = arith.divf %468, %469 : vector<8x128xf32>
    %471 = math.tanh %465 : vector<8x128xf32>
    %472 = vector.extract_strided_slice %470 {offsets = [0, 32], sizes = [8, 32], strides = [1, 1]} : vector<8x128xf32> to vector<8x32xf32>
    %473 = arith.mulf %472, %412 : vector<8x32xf32>
    %474 = vector.extract_strided_slice %470 {offsets = [0, 0], sizes = [8, 32], strides = [1, 1]} : vector<8x128xf32> to vector<8x32xf32>
    %475 = vector.extract_strided_slice %471 {offsets = [0, 64], sizes = [8, 32], strides = [1, 1]} : vector<8x128xf32> to vector<8x32xf32>
    %476 = arith.mulf %474, %475 : vector<8x32xf32>
    %477 = arith.addf %473, %476 : vector<8x32xf32>
    %478 = vector.extract_strided_slice %470 {offsets = [0, 96], sizes = [8, 32], strides = [1, 1]} : vector<8x128xf32> to vector<8x32xf32>
    %479 = math.tanh %477 : vector<8x32xf32>
    %480 = arith.mulf %478, %479 : vector<8x32xf32>
    %cst_67 = arith.constant 0.000000e+00 : f32
    %481 = vector.broadcast %cst_67 : f32 to vector<8x32xf32>
    %482 = arith.maximumf %480, %481 : vector<8x32xf32>
    %cst_68 = arith.constant dense<0.000000e+00> : vector<8x8xf32>
    %483 = tpu.matmul %482, %3, %cst_68 {dimension_numbers = #tpu.dot_dimension_numbers<[1], [0], [0], [1], [0, 0, 1, 1], [], []>} : vector<8x32xf32>, vector<32x8xf32>, vector<8x8xf32> -> vector<8x8xf32>
    %484 = vector.broadcast %5 : vector<1x8xf32> to vector<8x8xf32>
    %485 = arith.addf %483, %484 : vector<8x8xf32>
    %c104 = arith.constant 104 : index
    %c0_69 = arith.constant 0 : index
    %486 = vector.load %arg2[%c104, %c0_69] : memref<176x8xf32, #tpu.memory_space<vmem>>, vector<8x8xf32>
    %487 = arith.mulf %485, %486 : vector<8x8xf32>
    %488 = arith.addf %423, %487 : vector<8x8xf32>
    %489 = vector.broadcast %8 : vector<1x8xf32> to vector<8x8xf32>
    %490 = arith.addf %485, %489 : vector<8x8xf32>
    %491 = math.exp %490 : vector<8x8xf32>
    %492 = vector.extract_strided_slice %462 {offsets = [0, 0], sizes = [8, 1], strides = [1, 1]} : vector<8x8xf32> to vector<8x1xf32>
    %493 = vector.broadcast %492 : vector<8x1xf32> to vector<8x8xf32>
    %494 = arith.mulf %493, %15 : vector<8x8xf32>
    %495 = vector.extract_strided_slice %462 {offsets = [0, 1], sizes = [8, 1], strides = [1, 1]} : vector<8x8xf32> to vector<8x1xf32>
    %496 = vector.broadcast %495 : vector<8x1xf32> to vector<8x8xf32>
    %497 = arith.mulf %496, %18 : vector<8x8xf32>
    %498 = vector.extract_strided_slice %462 {offsets = [0, 2], sizes = [8, 1], strides = [1, 1]} : vector<8x8xf32> to vector<8x1xf32>
    %499 = vector.broadcast %498 : vector<8x1xf32> to vector<8x8xf32>
    %500 = arith.mulf %499, %21 : vector<8x8xf32>
    %501 = vector.extract_strided_slice %462 {offsets = [0, 3], sizes = [8, 1], strides = [1, 1]} : vector<8x8xf32> to vector<8x1xf32>
    %502 = vector.broadcast %501 : vector<8x1xf32> to vector<8x8xf32>
    %503 = arith.mulf %502, %24 : vector<8x8xf32>
    %504 = vector.extract_strided_slice %462 {offsets = [0, 4], sizes = [8, 1], strides = [1, 1]} : vector<8x8xf32> to vector<8x1xf32>
    %505 = vector.broadcast %504 : vector<8x1xf32> to vector<8x8xf32>
    %506 = arith.mulf %505, %27 : vector<8x8xf32>
    %507 = vector.extract_strided_slice %462 {offsets = [0, 5], sizes = [8, 1], strides = [1, 1]} : vector<8x8xf32> to vector<8x1xf32>
    %508 = vector.broadcast %507 : vector<8x1xf32> to vector<8x8xf32>
    %509 = arith.mulf %508, %30 : vector<8x8xf32>
    %510 = vector.extract_strided_slice %462 {offsets = [0, 6], sizes = [8, 1], strides = [1, 1]} : vector<8x8xf32> to vector<8x1xf32>
    %511 = vector.broadcast %510 : vector<8x1xf32> to vector<8x8xf32>
    %512 = arith.mulf %511, %33 : vector<8x8xf32>
    %513 = vector.extract_strided_slice %462 {offsets = [0, 7], sizes = [8, 1], strides = [1, 1]} : vector<8x8xf32> to vector<8x1xf32>
    %514 = vector.broadcast %513 : vector<8x1xf32> to vector<8x8xf32>
    %515 = arith.mulf %514, %36 : vector<8x8xf32>
    %516 = arith.addf %494, %497 : vector<8x8xf32>
    %517 = arith.addf %500, %503 : vector<8x8xf32>
    %518 = arith.addf %506, %509 : vector<8x8xf32>
    %519 = arith.addf %512, %515 : vector<8x8xf32>
    %520 = arith.addf %516, %517 : vector<8x8xf32>
    %521 = arith.addf %518, %519 : vector<8x8xf32>
    %522 = arith.addf %520, %521 : vector<8x8xf32>
    %523 = arith.mulf %522, %491 : vector<8x8xf32>
    %c168 = arith.constant 168 : index
    %c0_70 = arith.constant 0 : index
    %524 = vector.load %arg2[%c168, %c0_70] : memref<176x8xf32, #tpu.memory_space<vmem>>, vector<8x8xf32>
    %cst_71 = arith.constant 0.000000e+00 : f32
    %525 = vector.broadcast %cst_71 : f32 to vector<8x8xf32>
    %526 = arith.cmpf ogt, %524, %525 : vector<8x8xf32>
    %527 = arith.select %526, %523, %462 : vector<8x8xi1>, vector<8x8xf32>
    %528 = vector.broadcast %7 : vector<1x8xf32> to vector<8x8xf32>
    %529 = arith.mulf %527, %528 : vector<8x8xf32>
    %cst_72 = arith.constant dense<0.000000e+00> : vector<8xf32>
    %530 = vector.multi_reduction <add>, %529, %cst_72 [1] : vector<8x8xf32> to vector<8xf32>
    %531 = vector.shape_cast %530 : vector<8xf32> to vector<8x1xf32>
    %532 = math.log %531 : vector<8x1xf32>
    %533 = arith.addf %69, %532 : vector<8x1xf32>
    %cst_73 = arith.constant dense<0.000000e+00> : vector<8xf32>
    %534 = vector.multi_reduction <add>, %488, %cst_73 [1] : vector<8x8xf32> to vector<8xf32>
    %535 = vector.shape_cast %534 : vector<8xf32> to vector<8x1xf32>
    %536 = arith.subf %533, %535 : vector<8x1xf32>
    %537 = vector.shape_cast %536 : vector<8x1xf32> to vector<8x1xf32>
    %538 = vector.broadcast %537 : vector<8x1xf32> to vector<8x128xf32>
    %c0_74 = arith.constant 0 : index
    %c0_75 = arith.constant 0 : index
    %539 = vector.load %arg3[%c0_74, %c0_75] : memref<8x128xf32, #tpu.memory_space<vmem>>, vector<8x128xf32>
    tpu.vector_store %arg3[%c0_74, %c0_75], %538 {strides = array<i32>} : memref<8x128xf32, #tpu.memory_space<vmem>>, vector<8x128xf32>,
    return
  }
}

</mosaic_0001>

<llo_original>
// kernel: entity_labeler_loss.1
$region0: #{entity_labeler_loss.1}
  #allocation0 [shape = 'u32[]', space=smem, size = 0x4, offset = 0x4, fixed_abs, tag = 'smem constant byte address 0x4 - core index']
  #allocation1 [shape = 'u32[144,128]{1,0:T(1,128)}', space=vmem, size = 0x12000, scoped, tag = 'internal scratch']
  %s0 = inlined_call_operand.vmem [shape: f32[64,32], index: 0, kind: input, shape index: {}]
  %s1 = inlined_call_operand.vmem [shape: f32[72,128], index: 1, kind: input, shape index: {}]
  %s2 = inlined_call_operand.vmem [shape: f32[176,8], index: 2, kind: input, shape index: {}]
  %s3 = inlined_call_operand.vmem [shape: f32[8,128], index: 3, kind: output, shape index: {}]
  %s4 = sld [smem:[#allocation0]]
  $region22: #{entity_labeler_loss.1} parent=0
    _
  %s6 = ssub.s32 1, %s4
  %s7 = scalar_select 0, %s6, %s4
  // Predicated region
  $region2: #{entity_labeler_loss.1} parent=0 // pred_check
    _
  $region3: #{entity_labeler_loss.1} parent=0 // pred_check_branch
    %9 = sbr.rel (0) target = $region5
  $region4: #{entity_labeler_loss.1} parent=0 // pred_region
    _
  $region5: #{entity_labeler_loss.1} parent=0 // pred_fallthru
    _
  // Predicated region
  $region6: #{entity_labeler_loss.1} parent=0 // pred_check
    _
  $region7: #{entity_labeler_loss.1} parent=0 // pred_check_branch
    %11 = sbr.rel (0) target = $region9
  $region8: #{entity_labeler_loss.1} parent=0 // pred_region
    _
  $region9: #{entity_labeler_loss.1} parent=0 // pred_fallthru
    _
  // Predicated region
  $region10: #{entity_labeler_loss.1} parent=0 // pred_check
    _
  $region11: #{entity_labeler_loss.1} parent=0 // pred_check_branch
    %13 = sbr.rel (0) target = $region13
  $region12: #{entity_labeler_loss.1} parent=0 // pred_region
    _
  $region13: #{entity_labeler_loss.1} parent=0 // pred_fallthru
    _
  %v14 = vld [vmem:[%s1] sm:$0xff]
  %v15 = vld [vmem:[%s1 + $0x8] sm:$0xff]
  %v16 = vld [vmem:[%s1 + $0x10] sm:$0xff]
  %v17 = vld [vmem:[%s1 + $0x18] sm:$0xff]
  %v18 = vld [vmem:[%s1 + $0x20] sm:$0xff]
  %v19 = vld [vmem:[%s1 + $0x28] sm:$0xff]
  %v20 = vld [vmem:[%s1 + $0x30] sm:$0xff]
  %v21 = vld [vmem:[%s1 + $0x38] sm:$0xff]
  %v22 = vld [vmem:[%s1 + $0x40] sm:$0x1]
  %v23 = vld [vmem:[%s2] sm:$0xff]
  %v24 = vld [vmem:[%s2 + $0x8] sm:$0xff]
  %v25 = vld [vmem:[%s2 + $0x10] sm:$0xff]
  %v26 = vld [vmem:[%s2 + $0x18] sm:$0xff]
  %v27 = vld [vmem:[%s2 + $0x20] sm:$0xff]
  %v28 = vld [vmem:[%s2 + $0x28] sm:$0x1]
  %v29 = vld [vmem:[%s2 + $0x29] sm:$0x1]
  %v30 = vld [vmem:[%s2 + $0x2a] sm:$0x1]
  %v31 = vld [vmem:[%s2 + $0x2b] sm:$0x1]
  %v32 = vld [vmem:[%s0] sm:$0xff]
  %v33 = vld [vmem:[%s0 + $0x8] sm:$0xff]
  %v34 = vld [vmem:[%s0 + $0x10] sm:$0xff]
  %v35 = vld [vmem:[%s0 + $0x18] sm:$0xff]
  %v36 = vld [vmem:[%s0 + $0x20] sm:$0xff]
  %v37 = vld [vmem:[%s0 + $0x28] sm:$0xff]
  %v38 = vld [vmem:[%s0 + $0x30] sm:$0xff]
  %v39 = vld [vmem:[%s0 + $0x38] sm:$0xff]
  %v40 = vlaneseq
  %v41 = vshrl.u32 %v40, 7
  %v42 = vsub.s32 0, %v41
  %v43 = vrot.slane %v22, %v42
  %vm44 = vcmask 261120
  %v46 = vsel %vm44, %v32, 0
  %v49 = vsel %vm44, %v33, 0
  %v52 = vsel %vm44, %v34, 0
  %v55 = vsel %vm44, %v35, 0
  %v58 = vsel %vm44, %v36, 0
  %v61 = vsel %vm44, %v37, 0
  %v64 = vsel %vm44, %v38, 0
  %v67 = vsel %vm44, %v39, 0
  %69 = vmatprep.subr.mxu0 0.0
  %70 = vmatpush1.msra.mxu0 %v14
  %71 = vmatprep.subr.mxu0 0.0
  %72 = vmatpush1.msra.mxu0 %v15
  %73 = vmatprep.subr.mxu0 0.0
  %74 = vmatpush1.msra.mxu0 %v16
  %75 = vmatprep.subr.mxu0 0.0
  %76 = vmatpush1.msra.mxu0 %v17
  %77 = vmatprep.subr.mxu0 0.0
  %78 = vmatpush1.msra.mxu0 0.0
  %79 = vmatprep.subr.mxu0 0.0
  %80 = vmatpush1.msra.mxu0 0.0
  %81 = vmatprep.subr.mxu0 0.0
  %82 = vmatpush1.msra.mxu0 0.0
  %83 = vmatprep.subr.mxu0 0.0
  %84 = vmatpush1.msra.mxu0 0.0
  %85 = vmatprep.subr.mxu0 0.0
  %86 = vmatpush1.msra.mxu0 0.0
  %87 = vmatprep.subr.mxu0 0.0
  %88 = vmatpush1.msra.mxu0 0.0
  %89 = vmatprep.subr.mxu0 0.0
  %90 = vmatpush1.msra.mxu0 0.0
  %91 = vmatprep.subr.mxu0 0.0
  %92 = vmatpush1.msra.mxu0 0.0
  %93 = vmatprep.subr.mxu0 0.0
  %94 = vmatpush1.msra.mxu0 0.0
  %95 = vmatprep.subr.mxu0 0.0
  %96 = vmatpush1.msra.mxu0 0.0
  %97 = vmatprep.subr.mxu0 0.0
  %98 = vmatpush1.msra.mxu0 0.0
  %99 = vmatprep.subr.mxu0 0.0
  %100 = vmatpush1.msra.mxu0 0.0
  %101 = vmatprep.subr.mxu0 0.0
  %102 = vmatpush1.msra.mxu0 0.0
  %103 = vmatprep.subr.mxu0 0.0
  %104 = vmatpush1.msra.mxu0 0.0
  %105 = vmatprep.subr.mxu0 0.0
  %106 = vmatpush1.msra.mxu0 0.0
  %107 = vmatprep.subr.mxu0 0.0
  %108 = vmatpush1.msra.mxu0 0.0
  %109 = vmatprep.subr.mxu0 0.0
  %110 = vmatpush1.msra.mxu0 0.0
  %111 = vmatprep.subr.mxu0 0.0
  %112 = vmatpush1.msra.mxu0 0.0
  %113 = vmatprep.subr.mxu0 0.0
  %114 = vmatpush1.msra.mxu0 0.0
  %115 = vmatprep.subr.mxu0 0.0
  %116 = vmatpush1.msra.mxu0 0.0
  %117 = vmatprep.subr.mxu0 0.0
  %118 = vmatpush1.msra.mxu0 0.0
  %119 = vmatprep.subr.mxu0 0.0
  %120 = vmatpush1.msra.mxu0 0.0
  %121 = vmatprep.subr.mxu0 0.0
  %122 = vmatpush1.msra.mxu0 0.0
  %123 = vmatprep.subr.mxu0 0.0
  %124 = vmatpush1.msra.mxu0 0.0
  %125 = vmatprep.subr.mxu0 0.0
  %126 = vmatpush1.msra.mxu0 0.0
  %127 = vmatprep.subr.mxu0 0.0
  %128 = vmatpush1.msra.mxu0 0.0
  %129 = vmatprep.subr.mxu0 0.0
  %130 = vmatpush1.msra.mxu0 0.0
  %131 = vmatprep.subr.mxu0 0.0
  %132 = vmatpush1.msra.mxu0 0.0
  %133 = vmatprep.mubr.f32.mxu0 0.0
  %134 = vmatmul.mubr.f32.gmra.mrb[0].mxu0 %v46
  %v135 = vpop.f32.mrb[0].mxu0
  %v136 = vadd.f32 %v43, %v135
  %v137 = vpop.f32.mrb[0].mxu0
  %138 = vmatprep.mubr.f32.mxu0 0.0
  %139 = vmatmul.mubr.f32.gmra.mrb[0].mxu0 %v49
  %v140 = vpop.f32.mrb[0].mxu0
  %v141 = vadd.f32 %v43, %v140
  %v142 = vpop.f32.mrb[0].mxu0
  %143 = vmatprep.mubr.f32.mxu0 0.0
  %144 = vmatmul.mubr.f32.gmra.mrb[0].mxu0 %v52
  %v145 = vpop.f32.mrb[0].mxu0
  %v146 = vadd.f32 %v43, %v145
  %v147 = vpop.f32.mrb[0].mxu0
  %148 = vmatprep.mubr.f32.mxu0 0.0
  %149 = vmatmul.mubr.f32.gmra.mrb[0].mxu0 %v55
  %v150 = vpop.f32.mrb[0].mxu0
  %v151 = vadd.f32 %v43, %v150
  %v152 = vpop.f32.mrb[0].mxu0
  %153 = vmatprep.mubr.f32.mxu0 0.0
  %154 = vmatmul.mubr.f32.gmra.mrb[0].mxu0 %v58
  %v155 = vpop.f32.mrb[0].mxu0
  %v156 = vadd.f32 %v43, %v155
  %v157 = vpop.f32.mrb[0].mxu0
  %158 = vmatprep.mubr.f32.mxu0 0.0
  %159 = vmatmul.mubr.f32.gmra.mrb[0].mxu0 %v61
  %v160 = vpop.f32.mrb[0].mxu0
  %v161 = vadd.f32 %v43, %v160
  %v162 = vpop.f32.mrb[0].mxu0
  %163 = vmatprep.mubr.f32.mxu0 0.0
  %164 = vmatmul.mubr.f32.gmra.mrb[0].mxu0 %v64
  %v165 = vpop.f32.mrb[0].mxu0
  %v166 = vadd.f32 %v43, %v165
  %v167 = vpop.f32.mrb[0].mxu0
  %168 = vmatprep.mubr.f32.mxu0 0.0
  %169 = vmatmul.mubr.f32.gmra.mrb[0].mxu0 %v67
  %v170 = vpop.f32.mrb[0].mxu0
  %v171 = vadd.f32 %v43, %v170
  %v172 = vpop.f32.mrb[0].mxu0
  %173 = vdwg.mxu0
  %v174 = vlaneseq
  %v175 = vshrl.u32 %v174, 7
  %v176 = vsub.s32 0, %v175
  %v177 = vrot.slane %v27, %v176
  %v178 = vlaneseq
  %v179 = vshrl.u32 %v178, 7
  %v180 = vsub.s32 1, %v179
  %v181 = vrot.slane %v27, %v180
  %v182 = vlaneseq
  %v183 = vshrl.u32 %v182, 7
  %v184 = vsub.s32 2, %v183
  %v185 = vrot.slane %v27, %v184
  %v186 = vlaneseq
  %v187 = vshrl.u32 %v186, 7
  %v188 = vsub.s32 3, %v187
  %v189 = vrot.slane %v27, %v188
  %v190 = vlaneseq
  %v191 = vshrl.u32 %v190, 7
  %v192 = vsub.s32 4, %v191
  %v193 = vrot.slane %v27, %v192
  %v194 = vlaneseq
  %v195 = vshrl.u32 %v194, 7
  %v196 = vsub.s32 5, %v195
  %v197 = vrot.slane %v27, %v196
  %v198 = vlaneseq
  %v199 = vshrl.u32 %v198, 7
  %v200 = vsub.s32 6, %v199
  %v201 = vrot.slane %v27, %v200
  %v202 = vlaneseq
  %v203 = vshrl.u32 %v202, 7
  %v204 = vsub.s32 7, %v203
  %v205 = vrot.slane %v27, %v204
  %v207 = vsel %vm44, 0.0, 0
  %209 = vmatprep.subr.mxu0 0.0
  %210 = vmatpush1.msra.mxu0 %v18
  %211 = vmatprep.subr.mxu0 0.0
  %212 = vmatpush1.msra.mxu0 %v19
  %213 = vmatprep.subr.mxu0 0.0
  %214 = vmatpush1.msra.mxu0 %v20
  %215 = vmatprep.subr.mxu0 0.0
  %216 = vmatpush1.msra.mxu0 %v21
  %217 = vmatprep.subr.mxu0 0.0
  %218 = vmatpush1.msra.mxu0 0.0
  %219 = vmatprep.subr.mxu0 0.0
  %220 = vmatpush1.msra.mxu0 0.0
  %221 = vmatprep.subr.mxu0 0.0
  %222 = vmatpush1.msra.mxu0 0.0
  %223 = vmatprep.subr.mxu0 0.0
  %224 = vmatpush1.msra.mxu0 0.0
  %225 = vmatprep.subr.mxu0 0.0
  %226 = vmatpush1.msra.mxu0 0.0
  %227 = vmatprep.subr.mxu0 0.0
  %228 = vmatpush1.msra.mxu0 0.0
  %229 = vmatprep.subr.mxu0 0.0
  %230 = vmatpush1.msra.mxu0 0.0
  %231 = vmatprep.subr.mxu0 0.0
  %232 = vmatpush1.msra.mxu0 0.0
  %233 = vmatprep.subr.mxu0 0.0
  %234 = vmatpush1.msra.mxu0 0.0
  %235 = vmatprep.subr.mxu0 0.0
  %236 = vmatpush1.msra.mxu0 0.0
  %237 = vmatprep.subr.mxu0 0.0
  %238 = vmatpush1.msra.mxu0 0.0
  %239 = vmatprep.subr.mxu0 0.0
  %240 = vmatpush1.msra.mxu0 0.0
  %241 = vmatprep.subr.mxu0 0.0
  %242 = vmatpush1.msra.mxu0 0.0
  %243 = vmatprep.subr.mxu0 0.0
  %244 = vmatpush1.msra.mxu0 0.0
  %245 = vmatprep.subr.mxu0 0.0
  %246 = vmatpush1.msra.mxu0 0.0
  %247 = vmatprep.subr.mxu0 0.0
  %248 = vmatpush1.msra.mxu0 0.0
  %249 = vmatprep.subr.mxu0 0.0
  %250 = vmatpush1.msra.mxu0 0.0
  %251 = vmatprep.subr.mxu0 0.0
  %252 = vmatpush1.msra.mxu0 0.0
  %253 = vmatprep.subr.mxu0 0.0
  %254 = vmatpush1.msra.mxu0 0.0
  %255 = vmatprep.subr.mxu0 0.0
  %256 = vmatpush1.msra.mxu0 0.0
  %257 = vmatprep.subr.mxu0 0.0
  %258 = vmatpush1.msra.mxu0 0.0
  %259 = vmatprep.subr.mxu0 0.0
  %260 = vmatpush1.msra.mxu0 0.0
  %261 = vmatprep.subr.mxu0 0.0
  %262 = vmatpush1.msra.mxu0 0.0
  %263 = vmatprep.subr.mxu0 0.0
  %264 = vmatpush1.msra.mxu0 0.0
  %265 = vmatprep.subr.mxu0 0.0
  %266 = vmatpush1.msra.mxu0 0.0
  %267 = vmatprep.subr.mxu0 0.0
  %268 = vmatpush1.msra.mxu0 0.0
  %269 = vmatprep.subr.mxu0 0.0
  %270 = vmatpush1.msra.mxu0 0.0
  %271 = vmatprep.subr.mxu0 0.0
  %272 = vmatpush1.msra.mxu0 0.0
  %273 = vmatprep.mubr.f32.mxu0 0.0
  %274 = vmatmul.mubr.f32.gmra.mrb[0].mxu0 %v207
  %v275 = vpop.f32.mrb[0].mxu0
  %v276 = vadd.f32 0.0, %v275
  %v277 = vpop.f32.mrb[0].mxu0
  %278 = vdwg.mxu0
  %v279 = vadd.f32 %v136, %v276
  %v280 = vxor.u32 %v279, 2147483648
  %v281 = vmul.f32 %v280, 1.442695
  %v282 = vpow.pop %v281
  %v283 = vadd.f32 %v282, 1.0
  %v284 = vrcp.pop %v283
  %v285 = vmul.f32 1.0, %v284
  %v286 = vtanh.pop %v279
  %v287 = vmul.f32 %v285, 0.0
  %289 = vrot.lane.b32.xlu0 %v286, 64
  %v290 = vpop.permute.xlu0 %289
  %v292 = vmul.f32 %v285, %v290
  %294 = vrot.lane.b32.xlu0 %v292, 32
  %v295 = vpop.permute.xlu0 %294
  %v297 = vadd.f32 %v287, %v295
  %v298 = vtanh.pop %v297
  %300 = vrot.lane.b32.xlu0 %v298, 64
  %v301 = vpop.permute.xlu0 %300
  %v303 = vmul.f32 %v285, %v301
  %v304 = vmax.f32 %v303, 0.0
  %v305 = vlaneseq
  %v306 = vshrl.u32 %v305, 7
  %v307 = vsub.s32 0, %v306
  %v308 = vrot.slane %v28, %v307
  %310 = vrot.lane.b32.xlu0 %v304, 32
  %v311 = vpop.permute.xlu0 %310
  %v312 = vsel %vm44, %v311, 0
  %314 = vmatprep.subr.mxu0 0.0
  %315 = vmatpush1.msra.mxu0 %v23
  %316 = vmatprep.subr.mxu0 0.0
  %317 = vmatpush1.msra.mxu0 %v24
  %318 = vmatprep.subr.mxu0 0.0
  %319 = vmatpush1.msra.mxu0 %v25
  %320 = vmatprep.subr.mxu0 0.0
  %321 = vmatpush1.msra.mxu0 %v26
  %322 = vmatprep.subr.mxu0 0.0
  %323 = vmatpush1.msra.mxu0 0.0
  %324 = vmatprep.subr.mxu0 0.0
  %325 = vmatpush1.msra.mxu0 0.0
  %326 = vmatprep.subr.mxu0 0.0
  %327 = vmatpush1.msra.mxu0 0.0
  %328 = vmatprep.subr.mxu0 0.0
  %329 = vmatpush1.msra.mxu0 0.0
  %330 = vmatprep.subr.mxu0 0.0
  %331 = vmatpush1.msra.mxu0 0.0
  %332 = vmatprep.subr.mxu0 0.0
  %333 = vmatpush1.msra.mxu0 0.0
  %334 = vmatprep.subr.mxu0 0.0
  %335 = vmatpush1.msra.mxu0 0.0
  %336 = vmatprep.subr.mxu0 0.0
  %337 = vmatpush1.msra.mxu0 0.0
  %338 = vmatprep.subr.mxu0 0.0
  %339 = vmatpush1.msra.mxu0 0.0
  %340 = vmatprep.subr.mxu0 0.0
  %341 = vmatpush1.msra.mxu0 0.0
  %342 = vmatprep.subr.mxu0 0.0
  %343 = vmatpush1.msra.mxu0 0.0
  %344 = vmatprep.subr.mxu0 0.0
  %345 = vmatpush1.msra.mxu0 0.0
  %346 = vmatprep.subr.mxu0 0.0
  %347 = vmatpush1.msra.mxu0 0.0
  %348 = vmatprep.subr.mxu0 0.0
  %349 = vmatpush1.msra.mxu0 0.0
  %350 = vmatprep.subr.mxu0 0.0
  %351 = vmatpush1.msra.mxu0 0.0
  %352 = vmatprep.subr.mxu0 0.0
  %353 = vmatpush1.msra.mxu0 0.0
  %354 = vmatprep.subr.mxu0 0.0
  %355 = vmatpush1.msra.mxu0 0.0
  %356 = vmatprep.subr.mxu0 0.0
  %357 = vmatpush1.msra.mxu0 0.0
  %358 = vmatprep.subr.mxu0 0.0
  %359 = vmatpush1.msra.mxu0 0.0
  %360 = vmatprep.subr.mxu0 0.0
  %361 = vmatpush1.msra.mxu0 0.0
  %362 = vmatprep.subr.mxu0 0.0
  %363 = vmatpush1.msra.mxu0 0.0
  %364 = vmatprep.subr.mxu0 0.0
  %365 = vmatpush1.msra.mxu0 0.0
  %366 = vmatprep.subr.mxu0 0.0
  %367 = vmatpush1.msra.mxu0 0.0
  %368 = vmatprep.subr.mxu0 0.0
  %369 = vmatpush1.msra.mxu0 0.0
  %370 = vmatprep.subr.mxu0 0.0
  %371 = vmatpush1.msra.mxu0 0.0
  %372 = vmatprep.subr.mxu0 0.0
  %373 = vmatpush1.msra.mxu0 0.0
  %374 = vmatprep.subr.mxu0 0.0
  %375 = vmatpush1.msra.mxu0 0.0
  %376 = vmatprep.subr.mxu0 0.0
  %377 = vmatpush1.msra.mxu0 0.0
  %378 = vmatprep.mubr.f32.mxu0 0.0
  %379 = vmatmul.mubr.f32.gmra.mrb[0].mxu0 %v312
  %v380 = vpop.f32.mrb[0].mxu0
  %v381 = vadd.f32 %v308, %v380
  %v382 = vpop.f32.mrb[0].mxu0
  %383 = vdwg.mxu0
  %v384 = vld [vmem:[%s2 + $0x30] sm:$0xff]
  %v385 = vmul.f32 %v381, %v384
  %v386 = vadd.f32 %v385, 0.0
  %v387 = vlaneseq
  %v388 = vshrl.u32 %v387, 7
  %v389 = vsub.s32 0, %v388
  %v390 = vrot.slane %v29, %v389
  %v391 = vadd.f32 %v390, %v381
  %vm392 = vcmask 64512
  %v393 = vsel %vm392, %v391, -inf
  %394 = vmax.xlane.f32.xlu0 %v393
  %v395 = vpop.xlane.xlu0 %394
  %v396 = vsub.f32 %v391, %v395
  %v397 = vmul.f32 %v396, 1.442695
  %v398 = vpow.pop %v397
  %400 = vrot.lane.b32.xlu0 %v303, 32
  %v401 = vpop.permute.xlu0 %400
  %v402 = vsel %vm44, %v401, 0
  %404 = vmatprep.subr.mxu0 0.0
  %405 = vmatpush1.msra.mxu0 %v18
  %406 = vmatprep.subr.mxu0 0.0
  %407 = vmatpush1.msra.mxu0 %v19
  %408 = vmatprep.subr.mxu0 0.0
  %409 = vmatpush1.msra.mxu0 %v20
  %410 = vmatprep.subr.mxu0 0.0
  %411 = vmatpush1.msra.mxu0 %v21
  %412 = vmatprep.subr.mxu0 0.0
  %413 = vmatpush1.msra.mxu0 0.0
  %414 = vmatprep.subr.mxu0 0.0
  %415 = vmatpush1.msra.mxu0 0.0
  %416 = vmatprep.subr.mxu0 0.0
  %417 = vmatpush1.msra.mxu0 0.0
  %418 = vmatprep.subr.mxu0 0.0
  %419 = vmatpush1.msra.mxu0 0.0
  %420 = vmatprep.subr.mxu0 0.0
  %421 = vmatpush1.msra.mxu0 0.0
  %422 = vmatprep.subr.mxu0 0.0
  %423 = vmatpush1.msra.mxu0 0.0
  %424 = vmatprep.subr.mxu0 0.0
  %425 = vmatpush1.msra.mxu0 0.0
  %426 = vmatprep.subr.mxu0 0.0
  %427 = vmatpush1.msra.mxu0 0.0
  %428 = vmatprep.subr.mxu0 0.0
  %429 = vmatpush1.msra.mxu0 0.0
  %430 = vmatprep.subr.mxu0 0.0
  %431 = vmatpush1.msra.mxu0 0.0
  %432 = vmatprep.subr.mxu0 0.0
  %433 = vmatpush1.msra.mxu0 0.0
  %434 = vmatprep.subr.mxu0 0.0
  %435 = vmatpush1.msra.mxu0 0.0
  %436 = vmatprep.subr.mxu0 0.0
  %437 = vmatpush1.msra.mxu0 0.0
  %438 = vmatprep.subr.mxu0 0.0
  %439 = vmatpush1.msra.mxu0 0.0
  %440 = vmatprep.subr.mxu0 0.0
  %441 = vmatpush1.msra.mxu0 0.0
  %442 = vmatprep.subr.mxu0 0.0
  %443 = vmatpush1.msra.mxu0 0.0
  %444 = vmatprep.subr.mxu0 0.0
  %445 = vmatpush1.msra.mxu0 0.0
  %446 = vmatprep.subr.mxu0 0.0
  %447 = vmatpush1.msra.mxu0 0.0
  %448 = vmatprep.subr.mxu0 0.0
  %449 = vmatpush1.msra.mxu0 0.0
  %450 = vmatprep.subr.mxu0 0.0
  %451 = vmatpush1.msra.mxu0 0.0
  %452 = vmatprep.subr.mxu0 0.0
  %453 = vmatpush1.msra.mxu0 0.0
  %454 = vmatprep.subr.mxu0 0.0
  %455 = vmatpush1.msra.mxu0 0.0
  %456 = vmatprep.subr.mxu0 0.0
  %457 = vmatpush1.msra.mxu0 0.0
  %458 = vmatprep.subr.mxu0 0.0
  %459 = vmatpush1.msra.mxu0 0.0
  %460 = vmatprep.subr.mxu0 0.0
  %461 = vmatpush1.msra.mxu0 0.0
  %462 = vmatprep.subr.mxu0 0.0
  %463 = vmatpush1.msra.mxu0 0.0
  %464 = vmatprep.subr.mxu0 0.0
  %465 = vmatpush1.msra.mxu0 0.0
  %466 = vmatprep.subr.mxu0 0.0
  %467 = vmatpush1.msra.mxu0 0.0
  %468 = vmatprep.mubr.f32.mxu0 0.0
  %469 = vmatmul.mubr.f32.gmra.mrb[0].mxu0 %v402
  %v470 = vpop.f32.mrb[0].mxu0
  %v471 = vadd.f32 0.0, %v470
  %v472 = vpop.f32.mrb[0].mxu0
  %473 = vdwg.mxu0
  %v474 = vadd.f32 %v141, %v471
  %v475 = vxor.u32 %v474, 2147483648
  %v476 = vmul.f32 %v475, 1.442695
  %v477 = vpow.pop %v476
  %v478 = vadd.f32 %v477, 1.0
  %v479 = vrcp.pop %v478
  %v480 = vmul.f32 1.0, %v479
  %v481 = vtanh.pop %v474
  %v482 = vmul.f32 %v480, %v297
  %484 = vrot.lane.b32.xlu0 %v481, 64
  %v485 = vpop.permute.xlu0 %484
  %v487 = vmul.f32 %v480, %v485
  %489 = vrot.lane.b32.xlu0 %v487, 32
  %v490 = vpop.permute.xlu0 %489
  %v492 = vadd.f32 %v482, %v490
  %v493 = vtanh.pop %v492
  %495 = vrot.lane.b32.xlu0 %v493, 64
  %v496 = vpop.permute.xlu0 %495
  %v498 = vmul.f32 %v480, %v496
  %v499 = vmax.f32 %v498, 0.0
  %501 = vrot.lane.b32.xlu0 %v499, 32
  %v502 = vpop.permute.xlu0 %501
  %v503 = vsel %vm44, %v502, 0
  %505 = vmatprep.subr.mxu0 0.0
  %506 = vmatpush1.msra.mxu0 %v23
  %507 = vmatprep.subr.mxu0 0.0
  %508 = vmatpush1.msra.mxu0 %v24
  %509 = vmatprep.subr.mxu0 0.0
  %510 = vmatpush1.msra.mxu0 %v25
  %511 = vmatprep.subr.mxu0 0.0
  %512 = vmatpush1.msra.mxu0 %v26
  %513 = vmatprep.subr.mxu0 0.0
  %514 = vmatpush1.msra.mxu0 0.0
  %515 = vmatprep.subr.mxu0 0.0
  %516 = vmatpush1.msra.mxu0 0.0
  %517 = vmatprep.subr.mxu0 0.0
  %518 = vmatpush1.msra.mxu0 0.0
  %519 = vmatprep.subr.mxu0 0.0
  %520 = vmatpush1.msra.mxu0 0.0
  %521 = vmatprep.subr.mxu0 0.0
  %522 = vmatpush1.msra.mxu0 0.0
  %523 = vmatprep.subr.mxu0 0.0
  %524 = vmatpush1.msra.mxu0 0.0
  %525 = vmatprep.subr.mxu0 0.0
  %526 = vmatpush1.msra.mxu0 0.0
  %527 = vmatprep.subr.mxu0 0.0
  %528 = vmatpush1.msra.mxu0 0.0
  %529 = vmatprep.subr.mxu0 0.0
  %530 = vmatpush1.msra.mxu0 0.0
  %531 = vmatprep.subr.mxu0 0.0
  %532 = vmatpush1.msra.mxu0 0.0
  %533 = vmatprep.subr.mxu0 0.0
  %534 = vmatpush1.msra.mxu0 0.0
  %535 = vmatprep.subr.mxu0 0.0
  %536 = vmatpush1.msra.mxu0 0.0
  %537 = vmatprep.subr.mxu0 0.0
  %538 = vmatpush1.msra.mxu0 0.0
  %539 = vmatprep.subr.mxu0 0.0
  %540 = vmatpush1.msra.mxu0 0.0
  %541 = vmatprep.subr.mxu0 0.0
  %542 = vmatpush1.msra.mxu0 0.0
  %543 = vmatprep.subr.mxu0 0.0
  %544 = vmatpush1.msra.mxu0 0.0
  %545 = vmatprep.subr.mxu0 0.0
  %546 = vmatpush1.msra.mxu0 0.0
  %547 = vmatprep.subr.mxu0 0.0
  %548 = vmatpush1.msra.mxu0 0.0
  %549 = vmatprep.subr.mxu0 0.0
  %550 = vmatpush1.msra.mxu0 0.0
  %551 = vmatprep.subr.mxu0 0.0
  %552 = vmatpush1.msra.mxu0 0.0
  %553 = vmatprep.subr.mxu0 0.0
  %554 = vmatpush1.msra.mxu0 0.0
  %555 = vmatprep.subr.mxu0 0.0
  %556 = vmatpush1.msra.mxu0 0.0
  %557 = vmatprep.subr.mxu0 0.0
  %558 = vmatpush1.msra.mxu0 0.0
  %559 = vmatprep.subr.mxu0 0.0
  %560 = vmatpush1.msra.mxu0 0.0
  %561 = vmatprep.subr.mxu0 0.0
  %562 = vmatpush1.msra.mxu0 0.0
  %563 = vmatprep.subr.mxu0 0.0
  %564 = vmatpush1.msra.mxu0 0.0
  %565 = vmatprep.subr.mxu0 0.0
  %566 = vmatpush1.msra.mxu0 0.0
  %567 = vmatprep.subr.mxu0 0.0
  %568 = vmatpush1.msra.mxu0 0.0
  %569 = vmatprep.mubr.f32.mxu0 0.0
  %570 = vmatmul.mubr.f32.gmra.mrb[0].mxu0 %v503
  %v571 = vpop.f32.mrb[0].mxu0
  %v572 = vadd.f32 %v308, %v571
  %v573 = vpop.f32.mrb[0].mxu0
  %574 = vdwg.mxu0
  %v575 = vld [vmem:[%s2 + $0x38] sm:$0xff]
  %v576 = vmul.f32 %v572, %v575
  %v577 = vadd.f32 %v386, %v576
  %v578 = vlaneseq
  %v579 = vshrl.u32 %v578, 7
  %v580 = vsub.s32 0, %v579
  %v581 = vrot.slane %v31, %v580
  %v582 = vadd.f32 %v572, %v581
  %v583 = vmul.f32 %v582, 1.442695
  %v584 = vpow.pop %v583
  %586 = vset.pattern.permute.xlu0 0
  %587 = vperm.xlu0 %586, %v398
  %v588 = vpop.permute.xlu0 %587
  %v590 = vmul.f32 %v588, %v177
  %591 = vset.pattern.permute.xlu0 1
  %592 = vperm.xlu0 %591, %v398
  %v593 = vpop.permute.xlu0 %592
  %v595 = vmul.f32 %v593, %v181
  %596 = vset.pattern.permute.xlu0 2
  %597 = vperm.xlu0 %596, %v398
  %v598 = vpop.permute.xlu0 %597
  %v600 = vmul.f32 %v598, %v185
  %601 = vset.pattern.permute.xlu0 3
  %602 = vperm.xlu0 %601, %v398
  %v603 = vpop.permute.xlu0 %602
  %v605 = vmul.f32 %v603, %v189
  %606 = vset.pattern.permute.xlu0 4
  %607 = vperm.xlu0 %606, %v398
  %v608 = vpop.permute.xlu0 %607
  %v610 = vmul.f32 %v608, %v193
  %611 = vset.pattern.permute.xlu0 5
  %612 = vperm.xlu0 %611, %v398
  %v613 = vpop.permute.xlu0 %612
  %v615 = vmul.f32 %v613, %v197
  %616 = vset.pattern.permute.xlu0 6
  %617 = vperm.xlu0 %616, %v398
  %v618 = vpop.permute.xlu0 %617
  %v620 = vmul.f32 %v618, %v201
  %621 = vset.pattern.permute.xlu0 7
  %622 = vperm.xlu0 %621, %v398
  %v623 = vpop.permute.xlu0 %622
  %v625 = vmul.f32 %v623, %v205
  %v626 = vadd.f32 %v590, %v595
  %v627 = vadd.f32 %v600, %v605
  %v628 = vadd.f32 %v610, %v615
  %v629 = vadd.f32 %v620, %v625
  %v630 = vadd.f32 %v626, %v627
  %v631 = vadd.f32 %v628, %v629
  %v632 = vadd.f32 %v630, %v631
  %v633 = vmul.f32 %v632, %v584
  %v634 = vld [vmem:[%s2 + $0x78] sm:$0xff]
  %vm635 = vcmp.gt.f32.partialorder %v634, 0.0
  %v636 = vsel %vm635, %v633, %v398
  %638 = vrot.lane.b32.xlu0 %v498, 32
  %v639 = vpop.permute.xlu0 %638
  %v640 = vsel %vm44, %v639, 0
  %642 = vmatprep.subr.mxu0 0.0
  %643 = vmatpush1.msra.mxu0 %v18
  %644 = vmatprep.subr.mxu0 0.0
  %645 = vmatpush1.msra.mxu0 %v19
  %646 = vmatprep.subr.mxu0 0.0
  %647 = vmatpush1.msra.mxu0 %v20
  %648 = vmatprep.subr.mxu0 0.0
  %649 = vmatpush1.msra.mxu0 %v21
  %650 = vmatprep.subr.mxu0 0.0
  %651 = vmatpush1.msra.mxu0 0.0
  %652 = vmatprep.subr.mxu0 0.0
  %653 = vmatpush1.msra.mxu0 0.0
  %654 = vmatprep.subr.mxu0 0.0
  %655 = vmatpush1.msra.mxu0 0.0
  %656 = vmatprep.subr.mxu0 0.0
  %657 = vmatpush1.msra.mxu0 0.0
  %658 = vmatprep.subr.mxu0 0.0
  %659 = vmatpush1.msra.mxu0 0.0
  %660 = vmatprep.subr.mxu0 0.0
  %661 = vmatpush1.msra.mxu0 0.0
  %662 = vmatprep.subr.mxu0 0.0
  %663 = vmatpush1.msra.mxu0 0.0
  %664 = vmatprep.subr.mxu0 0.0
  %665 = vmatpush1.msra.mxu0 0.0
  %666 = vmatprep.subr.mxu0 0.0
  %667 = vmatpush1.msra.mxu0 0.0
  %668 = vmatprep.subr.mxu0 0.0
  %669 = vmatpush1.msra.mxu0 0.0
  %670 = vmatprep.subr.mxu0 0.0
  %671 = vmatpush1.msra.mxu0 0.0
  %672 = vmatprep.subr.mxu0 0.0
  %673 = vmatpush1.msra.mxu0 0.0
  %674 = vmatprep.subr.mxu0 0.0
  %675 = vmatpush1.msra.mxu0 0.0
  %676 = vmatprep.subr.mxu0 0.0
  %677 = vmatpush1.msra.mxu0 0.0
  %678 = vmatprep.subr.mxu0 0.0
  %679 = vmatpush1.msra.mxu0 0.0
  %680 = vmatprep.subr.mxu0 0.0
  %681 = vmatpush1.msra.mxu0 0.0
  %682 = vmatprep.subr.mxu0 0.0
  %683 = vmatpush1.msra.mxu0 0.0
  %684 = vmatprep.subr.mxu0 0.0
  %685 = vmatpush1.msra.mxu0 0.0
  %686 = vmatprep.subr.mxu0 0.0
  %687 = vmatpush1.msra.mxu0 0.0
  %688 = vmatprep.subr.mxu0 0.0
  %689 = vmatpush1.msra.mxu0 0.0
  %690 = vmatprep.subr.mxu0 0.0
  %691 = vmatpush1.msra.mxu0 0.0
  %692 = vmatprep.subr.mxu0 0.0
  %693 = vmatpush1.msra.mxu0 0.0
  %694 = vmatprep.subr.mxu0 0.0
  %695 = vmatpush1.msra.mxu0 0.0
  %696 = vmatprep.subr.mxu0 0.0
  %697 = vmatpush1.msra.mxu0 0.0
  %698 = vmatprep.subr.mxu0 0.0
  %699 = vmatpush1.msra.mxu0 0.0
  %700 = vmatprep.subr.mxu0 0.0
  %701 = vmatpush1.msra.mxu0 0.0
  %702 = vmatprep.subr.mxu0 0.0
  %703 = vmatpush1.msra.mxu0 0.0
  %704 = vmatprep.subr.mxu0 0.0
  %705 = vmatpush1.msra.mxu0 0.0
  %706 = vmatprep.mubr.f32.mxu0 0.0
  %707 = vmatmul.mubr.f32.gmra.mrb[0].mxu0 %v640
  %v708 = vpop.f32.mrb[0].mxu0
  %v709 = vadd.f32 0.0, %v708
  %v710 = vpop.f32.mrb[0].mxu0
  %711 = vdwg.mxu0
  %v712 = vadd.f32 %v146, %v709
  %v713 = vxor.u32 %v712, 2147483648
  %v714 = vmul.f32 %v713, 1.442695
  %v715 = vpow.pop %v714
  %v716 = vadd.f32 %v715, 1.0
  %v717 = vrcp.pop %v716
  %v718 = vmul.f32 1.0, %v717
  %v719 = vtanh.pop %v712
  %v720 = vmul.f32 %v718, %v492
  %722 = vrot.lane.b32.xlu0 %v719, 64
  %v723 = vpop.permute.xlu0 %722
  %v725 = vmul.f32 %v718, %v723
  %727 = vrot.lane.b32.xlu0 %v725, 32
  %v728 = vpop.permute.xlu0 %727
  %v730 = vadd.f32 %v720, %v728
  %v731 = vtanh.pop %v730
  %733 = vrot.lane.b32.xlu0 %v731, 64
  %v734 = vpop.permute.xlu0 %733
  %v736 = vmul.f32 %v718, %v734
  %v737 = vmax.f32 %v736, 0.0
  %739 = vrot.lane.b32.xlu0 %v737, 32
  %v740 = vpop.permute.xlu0 %739
  %v741 = vsel %vm44, %v740, 0
  %743 = vmatprep.subr.mxu0 0.0
  %744 = vmatpush1.msra.mxu0 %v23
  %745 = vmatprep.subr.mxu0 0.0
  %746 = vmatpush1.msra.mxu0 %v24
  %747 = vmatprep.subr.mxu0 0.0
  %748 = vmatpush1.msra.mxu0 %v25
  %749 = vmatprep.subr.mxu0 0.0
  %750 = vmatpush1.msra.mxu0 %v26
  %751 = vmatprep.subr.mxu0 0.0
  %752 = vmatpush1.msra.mxu0 0.0
  %753 = vmatprep.subr.mxu0 0.0
  %754 = vmatpush1.msra.mxu0 0.0
  %755 = vmatprep.subr.mxu0 0.0
  %756 = vmatpush1.msra.mxu0 0.0
  %757 = vmatprep.subr.mxu0 0.0
  %758 = vmatpush1.msra.mxu0 0.0
  %759 = vmatprep.subr.mxu0 0.0
  %760 = vmatpush1.msra.mxu0 0.0
  %761 = vmatprep.subr.mxu0 0.0
  %762 = vmatpush1.msra.mxu0 0.0
  %763 = vmatprep.subr.mxu0 0.0
  %764 = vmatpush1.msra.mxu0 0.0
  %765 = vmatprep.subr.mxu0 0.0
  %766 = vmatpush1.msra.mxu0 0.0
  %767 = vmatprep.subr.mxu0 0.0
  %768 = vmatpush1.msra.mxu0 0.0
  %769 = vmatprep.subr.mxu0 0.0
  %770 = vmatpush1.msra.mxu0 0.0
  %771 = vmatprep.subr.mxu0 0.0
  %772 = vmatpush1.msra.mxu0 0.0
  %773 = vmatprep.subr.mxu0 0.0
  %774 = vmatpush1.msra.mxu0 0.0
  %775 = vmatprep.subr.mxu0 0.0
  %776 = vmatpush1.msra.mxu0 0.0
  %777 = vmatprep.subr.mxu0 0.0
  %778 = vmatpush1.msra.mxu0 0.0
  %779 = vmatprep.subr.mxu0 0.0
  %780 = vmatpush1.msra.mxu0 0.0
  %781 = vmatprep.subr.mxu0 0.0
  %782 = vmatpush1.msra.mxu0 0.0
  %783 = vmatprep.subr.mxu0 0.0
  %784 = vmatpush1.msra.mxu0 0.0
  %785 = vmatprep.subr.mxu0 0.0
  %786 = vmatpush1.msra.mxu0 0.0
  %787 = vmatprep.subr.mxu0 0.0
  %788 = vmatpush1.msra.mxu0 0.0
  %789 = vmatprep.subr.mxu0 0.0
  %790 = vmatpush1.msra.mxu0 0.0
  %791 = vmatprep.subr.mxu0 0.0
  %792 = vmatpush1.msra.mxu0 0.0
  %793 = vmatprep.subr.mxu0 0.0
  %794 = vmatpush1.msra.mxu0 0.0
  %795 = vmatprep.subr.mxu0 0.0
  %796 = vmatpush1.msra.mxu0 0.0
  %797 = vmatprep.subr.mxu0 0.0
  %798 = vmatpush1.msra.mxu0 0.0
  %799 = vmatprep.subr.mxu0 0.0
  %800 = vmatpush1.msra.mxu0 0.0
  %801 = vmatprep.subr.mxu0 0.0
  %802 = vmatpush1.msra.mxu0 0.0
  %803 = vmatprep.subr.mxu0 0.0
  %804 = vmatpush1.msra.mxu0 0.0
  %805 = vmatprep.subr.mxu0 0.0
  %806 = vmatpush1.msra.mxu0 0.0
  %807 = vmatprep.mubr.f32.mxu0 0.0
  %808 = vmatmul.mubr.f32.gmra.mrb[0].mxu0 %v741
  %v809 = vpop.f32.mrb[0].mxu0
  %v810 = vadd.f32 %v308, %v809
  %v811 = vpop.f32.mrb[0].mxu0
  %812 = vdwg.mxu0
  %v813 = vld [vmem:[%s2 + $0x40] sm:$0xff]
  %v814 = vmul.f32 %v810, %v813
  %v815 = vadd.f32 %v577, %v814
  %v816 = vadd.f32 %v810, %v581
  %v817 = vmul.f32 %v816, 1.442695
  %v818 = vpow.pop %v817
  %820 = vset.pattern.permute.xlu0 0
  %821 = vperm.xlu0 %820, %v636
  %v822 = vpop.permute.xlu0 %821
  %v824 = vmul.f32 %v822, %v177
  %825 = vset.pattern.permute.xlu0 1
  %826 = vperm.xlu0 %825, %v636
  %v827 = vpop.permute.xlu0 %826
  %v829 = vmul.f32 %v827, %v181
  %830 = vset.pattern.permute.xlu0 2
  %831 = vperm.xlu0 %830, %v636
  %v832 = vpop.permute.xlu0 %831
  %v834 = vmul.f32 %v832, %v185
  %835 = vset.pattern.permute.xlu0 3
  %836 = vperm.xlu0 %835, %v636
  %v837 = vpop.permute.xlu0 %836
  %v839 = vmul.f32 %v837, %v189
  %840 = vset.pattern.permute.xlu0 4
  %841 = vperm.xlu0 %840, %v636
  %v842 = vpop.permute.xlu0 %841
  %v844 = vmul.f32 %v842, %v193
  %845 = vset.pattern.permute.xlu0 5
  %846 = vperm.xlu0 %845, %v636
  %v847 = vpop.permute.xlu0 %846
  %v849 = vmul.f32 %v847, %v197
  %850 = vset.pattern.permute.xlu0 6
  %851 = vperm.xlu0 %850, %v636
  %v852 = vpop.permute.xlu0 %851
  %v854 = vmul.f32 %v852, %v201
  %855 = vset.pattern.permute.xlu0 7
  %856 = vperm.xlu0 %855, %v636
  %v857 = vpop.permute.xlu0 %856
  %v859 = vmul.f32 %v857, %v205
  %v860 = vadd.f32 %v824, %v829
  %v861 = vadd.f32 %v834, %v839
  %v862 = vadd.f32 %v844, %v849
  %v863 = vadd.f32 %v854, %v859
  %v864 = vadd.f32 %v860, %v861
  %v865 = vadd.f32 %v862, %v863
  %v866 = vadd.f32 %v864, %v865
  %v867 = vmul.f32 %v866, %v818
  %v868 = vld [vmem:[%s2 + $0x80] sm:$0xff]
  %vm869 = vcmp.gt.f32.partialorder %v868, 0.0
  %v870 = vsel %vm869, %v867, %v636
  %872 = vrot.lane.b32.xlu0 %v736, 32
  %v873 = vpop.permute.xlu0 %872
  %v874 = vsel %vm44, %v873, 0
  %876 = vmatprep.subr.mxu0 0.0
  %877 = vmatpush1.msra.mxu0 %v18
  %878 = vmatprep.subr.mxu0 0.0
  %879 = vmatpush1.msra.mxu0 %v19
  %880 = vmatprep.subr.mxu0 0.0
  %881 = vmatpush1.msra.mxu0 %v20
  %882 = vmatprep.subr.mxu0 0.0
  %883 = vmatpush1.msra.mxu0 %v21
  %884 = vmatprep.subr.mxu0 0.0
  %885 = vmatpush1.msra.mxu0 0.0
  %886 = vmatprep.subr.mxu0 0.0
  %887 = vmatpush1.msra.mxu0 0.0
  %888 = vmatprep.subr.mxu0 0.0
  %889 = vmatpush1.msra.mxu0 0.0
  %890 = vmatprep.subr.mxu0 0.0
  %891 = vmatpush1.msra.mxu0 0.0
  %892 = vmatprep.subr.mxu0 0.0
  %893 = vmatpush1.msra.mxu0 0.0
  %894 = vmatprep.subr.mxu0 0.0
  %895 = vmatpush1.msra.mxu0 0.0
  %896 = vmatprep.subr.mxu0 0.0
  %897 = vmatpush1.msra.mxu0 0.0
  %898 = vmatprep.subr.mxu0 0.0
  %899 = vmatpush1.msra.mxu0 0.0
  %900 = vmatprep.subr.mxu0 0.0
  %901 = vmatpush1.msra.mxu0 0.0
  %902 = vmatprep.subr.mxu0 0.0
  %903 = vmatpush1.msra.mxu0 0.0
  %904 = vmatprep.subr.mxu0 0.0
  %905 = vmatpush1.msra.mxu0 0.0
  %906 = vmatprep.subr.mxu0 0.0
  %907 = vmatpush1.msra.mxu0 0.0
  %908 = vmatprep.subr.mxu0 0.0
  %909 = vmatpush1.msra.mxu0 0.0
  %910 = vmatprep.subr.mxu0 0.0
  %911 = vmatpush1.msra.mxu0 0.0
  %912 = vmatprep.subr.mxu0 0.0
  %913 = vmatpush1.msra.mxu0 0.0
  %914 = vmatprep.subr.mxu0 0.0
  %915 = vmatpush1.msra.mxu0 0.0
  %916 = vmatprep.subr.mxu0 0.0
  %917 = vmatpush1.msra.mxu0 0.0
  %918 = vmatprep.subr.mxu0 0.0
  %919 = vmatpush1.msra.mxu0 0.0
  %920 = vmatprep.subr.mxu0 0.0
  %921 = vmatpush1.msra.mxu0 0.0
  %922 = vmatprep.subr.mxu0 0.0
  %923 = vmatpush1.msra.mxu0 0.0
  %924 = vmatprep.subr.mxu0 0.0
  %925 = vmatpush1.msra.mxu0 0.0
  %926 = vmatprep.subr.mxu0 0.0
  %927 = vmatpush1.msra.mxu0 0.0
  %928 = vmatprep.subr.mxu0 0.0
  %929 = vmatpush1.msra.mxu0 0.0
  %930 = vmatprep.subr.mxu0 0.0
  %931 = vmatpush1.msra.mxu0 0.0
  %932 = vmatprep.subr.mxu0 0.0
  %933 = vmatpush1.msra.mxu0 0.0
  %934 = vmatprep.subr.mxu0 0.0
  %935 = vmatpush1.msra.mxu0 0.0
  %936 = vmatprep.subr.mxu0 0.0
  %937 = vmatpush1.msra.mxu0 0.0
  %938 = vmatprep.subr.mxu0 0.0
  %939 = vmatpush1.msra.mxu0 0.0
  %940 = vmatprep.mubr.f32.mxu0 0.0
  %941 = vmatmul.mubr.f32.gmra.mrb[0].mxu0 %v874
  %v942 = vpop.f32.mrb[0].mxu0
  %v943 = vadd.f32 0.0, %v942
  %v944 = vpop.f32.mrb[0].mxu0
  %945 = vdwg.mxu0
  %v946 = vadd.f32 %v151, %v943
  %v947 = vxor.u32 %v946, 2147483648
  %v948 = vmul.f32 %v947, 1.442695
  %v949 = vpow.pop %v948
  %v950 = vadd.f32 %v949, 1.0
  %v951 = vrcp.pop %v950
  %v952 = vmul.f32 1.0, %v951
  %v953 = vtanh.pop %v946
  %v954 = vmul.f32 %v952, %v730
  %956 = vrot.lane.b32.xlu0 %v953, 64
  %v957 = vpop.permute.xlu0 %956
  %v959 = vmul.f32 %v952, %v957
  %961 = vrot.lane.b32.xlu0 %v959, 32
  %v962 = vpop.permute.xlu0 %961
  %v964 = vadd.f32 %v954, %v962
  %v965 = vtanh.pop %v964
  %967 = vrot.lane.b32.xlu0 %v965, 64
  %v968 = vpop.permute.xlu0 %967
  %v970 = vmul.f32 %v952, %v968
  %v971 = vmax.f32 %v970, 0.0
  %973 = vrot.lane.b32.xlu0 %v971, 32
  %v974 = vpop.permute.xlu0 %973
  %v975 = vsel %vm44, %v974, 0
  %977 = vmatprep.subr.mxu0 0.0
  %978 = vmatpush1.msra.mxu0 %v23
  %979 = vmatprep.subr.mxu0 0.0
  %980 = vmatpush1.msra.mxu0 %v24
  %981 = vmatprep.subr.mxu0 0.0
  %982 = vmatpush1.msra.mxu0 %v25
  %983 = vmatprep.subr.mxu0 0.0
  %984 = vmatpush1.msra.mxu0 %v26
  %985 = vmatprep.subr.mxu0 0.0
  %986 = vmatpush1.msra.mxu0 0.0
  %987 = vmatprep.subr.mxu0 0.0
  %988 = vmatpush1.msra.mxu0 0.0
  %989 = vmatprep.subr.mxu0 0.0
  %990 = vmatpush1.msra.mxu0 0.0
  %991 = vmatprep.subr.mxu0 0.0
  %992 = vmatpush1.msra.mxu0 0.0
  %993 = vmatprep.subr.mxu0 0.0
  %994 = vmatpush1.msra.mxu0 0.0
  %995 = vmatprep.subr.mxu0 0.0
  %996 = vmatpush1.msra.mxu0 0.0
  %997 = vmatprep.subr.mxu0 0.0
  %998 = vmatpush1.msra.mxu0 0.0
  %999 = vmatprep.subr.mxu0 0.0
  %1000 = vmatpush1.msra.mxu0 0.0
  %1001 = vmatprep.subr.mxu0 0.0
  %1002 = vmatpush1.msra.mxu0 0.0
  %1003 = vmatprep.subr.mxu0 0.0
  %1004 = vmatpush1.msra.mxu0 0.0
  %1005 = vmatprep.subr.mxu0 0.0
  %1006 = vmatpush1.msra.mxu0 0.0
  %1007 = vmatprep.subr.mxu0 0.0
  %1008 = vmatpush1.msra.mxu0 0.0
  %1009 = vmatprep.subr.mxu0 0.0
  %1010 = vmatpush1.msra.mxu0 0.0
  %1011 = vmatprep.subr.mxu0 0.0
  %1012 = vmatpush1.msra.mxu0 0.0
  %1013 = vmatprep.subr.mxu0 0.0
  %1014 = vmatpush1.msra.mxu0 0.0
  %1015 = vmatprep.subr.mxu0 0.0
  %1016 = vmatpush1.msra.mxu0 0.0
  %1017 = vmatprep.subr.mxu0 0.0
  %1018 = vmatpush1.msra.mxu0 0.0
  %1019 = vmatprep.subr.mxu0 0.0
  %1020 = vmatpush1.msra.mxu0 0.0
  %1021 = vmatprep.subr.mxu0 0.0
  %1022 = vmatpush1.msra.mxu0 0.0
  %1023 = vmatprep.subr.mxu0 0.0
  %1024 = vmatpush1.msra.mxu0 0.0
  %1025 = vmatprep.subr.mxu0 0.0
  %1026 = vmatpush1.msra.mxu0 0.0
  %1027 = vmatprep.subr.mxu0 0.0
  %1028 = vmatpush1.msra.mxu0 0.0
  %1029 = vmatprep.subr.mxu0 0.0
  %1030 = vmatpush1.msra.mxu0 0.0
  %1031 = vmatprep.subr.mxu0 0.0
  %1032 = vmatpush1.msra.mxu0 0.0
  %1033 = vmatprep.subr.mxu0 0.0
  %1034 = vmatpush1.msra.mxu0 0.0
  %1035 = vmatprep.subr.mxu0 0.0
  %1036 = vmatpush1.msra.mxu0 0.0
  %1037 = vmatprep.subr.mxu0 0.0
  %1038 = vmatpush1.msra.mxu0 0.0
  %1039 = vmatprep.subr.mxu0 0.0
  %1040 = vmatpush1.msra.mxu0 0.0
  %1041 = vmatprep.mubr.f32.mxu0 0.0
  %1042 = vmatmul.mubr.f32.gmra.mrb[0].mxu0 %v975
  %v1043 = vpop.f32.mrb[0].mxu0
  %v1044 = vadd.f32 %v308, %v1043
  %v1045 = vpop.f32.mrb[0].mxu0
  %1046 = vdwg.mxu0
  %v1047 = vld [vmem:[%s2 + $0x48] sm:$0xff]
  %v1048 = vmul.f32 %v1044, %v1047
  %v1049 = vadd.f32 %v815, %v1048
  %v1050 = vadd.f32 %v1044, %v581
  %v1051 = vmul.f32 %v1050, 1.442695
  %v1052 = vpow.pop %v1051
  %1054 = vset.pattern.permute.xlu0 0
  %1055 = vperm.xlu0 %1054, %v870
  %v1056 = vpop.permute.xlu0 %1055
  %v1058 = vmul.f32 %v1056, %v177
  %1059 = vset.pattern.permute.xlu0 1
  %1060 = vperm.xlu0 %1059, %v870
  %v1061 = vpop.permute.xlu0 %1060
  %v1063 = vmul.f32 %v1061, %v181
  %1064 = vset.pattern.permute.xlu0 2
  %1065 = vperm.xlu0 %1064, %v870
  %v1066 = vpop.permute.xlu0 %1065
  %v1068 = vmul.f32 %v1066, %v185
  %1069 = vset.pattern.permute.xlu0 3
  %1070 = vperm.xlu0 %1069, %v870
  %v1071 = vpop.permute.xlu0 %1070
  %v1073 = vmul.f32 %v1071, %v189
  %1074 = vset.pattern.permute.xlu0 4
  %1075 = vperm.xlu0 %1074, %v870
  %v1076 = vpop.permute.xlu0 %1075
  %v1078 = vmul.f32 %v1076, %v193
  %1079 = vset.pattern.permute.xlu0 5
  %1080 = vperm.xlu0 %1079, %v870
  %v1081 = vpop.permute.xlu0 %1080
  %v1083 = vmul.f32 %v1081, %v197
  %1084 = vset.pattern.permute.xlu0 6
  %1085 = vperm.xlu0 %1084, %v870
  %v1086 = vpop.permute.xlu0 %1085
  %v1088 = vmul.f32 %v1086, %v201
  %1089 = vset.pattern.permute.xlu0 7
  %1090 = vperm.xlu0 %1089, %v870
  %v1091 = vpop.permute.xlu0 %1090
  %v1093 = vmul.f32 %v1091, %v205
  %v1094 = vadd.f32 %v1058, %v1063
  %v1095 = vadd.f32 %v1068, %v1073
  %v1096 = vadd.f32 %v1078, %v1083
  %v1097 = vadd.f32 %v1088, %v1093
  %v1098 = vadd.f32 %v1094, %v1095
  %v1099 = vadd.f32 %v1096, %v1097
  %v1100 = vadd.f32 %v1098, %v1099
  %v1101 = vmul.f32 %v1100, %v1052
  %v1102 = vld [vmem:[%s2 + $0x88] sm:$0xff]
  %vm1103 = vcmp.gt.f32.partialorder %v1102, 0.0
  %v1104 = vsel %vm1103, %v1101, %v870
  %1106 = vrot.lane.b32.xlu0 %v970, 32
  %v1107 = vpop.permute.xlu0 %1106
  %v1108 = vsel %vm44, %v1107, 0
  %1110 = vmatprep.subr.mxu0 0.0
  %1111 = vmatpush1.msra.mxu0 %v18
  %1112 = vmatprep.subr.mxu0 0.0
  %1113 = vmatpush1.msra.mxu0 %v19
  %1114 = vmatprep.subr.mxu0 0.0
  %1115 = vmatpush1.msra.mxu0 %v20
  %1116 = vmatprep.subr.mxu0 0.0
  %1117 = vmatpush1.msra.mxu0 %v21
  %1118 = vmatprep.subr.mxu0 0.0
  %1119 = vmatpush1.msra.mxu0 0.0
  %1120 = vmatprep.subr.mxu0 0.0
  %1121 = vmatpush1.msra.mxu0 0.0
  %1122 = vmatprep.subr.mxu0 0.0
  %1123 = vmatpush1.msra.mxu0 0.0
  %1124 = vmatprep.subr.mxu0 0.0
  %1125 = vmatpush1.msra.mxu0 0.0
  %1126 = vmatprep.subr.mxu0 0.0
  %1127 = vmatpush1.msra.mxu0 0.0
  %1128 = vmatprep.subr.mxu0 0.0
  %1129 = vmatpush1.msra.mxu0 0.0
  %1130 = vmatprep.subr.mxu0 0.0
  %1131 = vmatpush1.msra.mxu0 0.0
  %1132 = vmatprep.subr.mxu0 0.0
  %1133 = vmatpush1.msra.mxu0 0.0
  %1134 = vmatprep.subr.mxu0 0.0
  %1135 = vmatpush1.msra.mxu0 0.0
  %1136 = vmatprep.subr.mxu0 0.0
  %1137 = vmatpush1.msra.mxu0 0.0
  %1138 = vmatprep.subr.mxu0 0.0
  %1139 = vmatpush1.msra.mxu0 0.0
  %1140 = vmatprep.subr.mxu0 0.0
  %1141 = vmatpush1.msra.mxu0 0.0
  %1142 = vmatprep.subr.mxu0 0.0
  %1143 = vmatpush1.msra.mxu0 0.0
  %1144 = vmatprep.subr.mxu0 0.0
  %1145 = vmatpush1.msra.mxu0 0.0
  %1146 = vmatprep.subr.mxu0 0.0
  %1147 = vmatpush1.msra.mxu0 0.0
  %1148 = vmatprep.subr.mxu0 0.0
  %1149 = vmatpush1.msra.mxu0 0.0
  %1150 = vmatprep.subr.mxu0 0.0
  %1151 = vmatpush1.msra.mxu0 0.0
  %1152 = vmatprep.subr.mxu0 0.0
  %1153 = vmatpush1.msra.mxu0 0.0
  %1154 = vmatprep.subr.mxu0 0.0
  %1155 = vmatpush1.msra.mxu0 0.0
  %1156 = vmatprep.subr.mxu0 0.0
  %1157 = vmatpush1.msra.mxu0 0.0
  %1158 = vmatprep.subr.mxu0 0.0
  %1159 = vmatpush1.msra.mxu0 0.0
  %1160 = vmatprep.subr.mxu0 0.0
  %1161 = vmatpush1.msra.mxu0 0.0
  %1162 = vmatprep.subr.mxu0 0.0
  %1163 = vmatpush1.msra.mxu0 0.0
  %1164 = vmatprep.subr.mxu0 0.0
  %1165 = vmatpush1.msra.mxu0 0.0
  %1166 = vmatprep.subr.mxu0 0.0
  %1167 = vmatpush1.msra.mxu0 0.0
  %1168 = vmatprep.subr.mxu0 0.0
  %1169 = vmatpush1.msra.mxu0 0.0
  %1170 = vmatprep.subr.mxu0 0.0
  %1171 = vmatpush1.msra.mxu0 0.0
  %1172 = vmatprep.subr.mxu0 0.0
  %1173 = vmatpush1.msra.mxu0 0.0
  %1174 = vmatprep.mubr.f32.mxu0 0.0
  %1175 = vmatmul.mubr.f32.gmra.mrb[0].mxu0 %v1108
  %v1176 = vpop.f32.mrb[0].mxu0
  %v1177 = vadd.f32 0.0, %v1176
  %v1178 = vpop.f32.mrb[0].mxu0
  %1179 = vdwg.mxu0
  %v1180 = vadd.f32 %v156, %v1177
  %v1181 = vxor.u32 %v1180, 2147483648
  %v1182 = vmul.f32 %v1181, 1.442695
  %v1183 = vpow.pop %v1182
  %v1184 = vadd.f32 %v1183, 1.0
  %v1185 = vrcp.pop %v1184
  %v1186 = vmul.f32 1.0, %v1185
  %v1187 = vtanh.pop %v1180
  %v1188 = vmul.f32 %v1186, %v964
  %1190 = vrot.lane.b32.xlu0 %v1187, 64
  %v1191 = vpop.permute.xlu0 %1190
  %v1193 = vmul.f32 %v1186, %v1191
  %1195 = vrot.lane.b32.xlu0 %v1193, 32
  %v1196 = vpop.permute.xlu0 %1195
  %v1198 = vadd.f32 %v1188, %v1196
  %v1199 = vtanh.pop %v1198
  %1201 = vrot.lane.b32.xlu0 %v1199, 64
  %v1202 = vpop.permute.xlu0 %1201
  %v1204 = vmul.f32 %v1186, %v1202
  %v1205 = vmax.f32 %v1204, 0.0
  %1207 = vrot.lane.b32.xlu0 %v1205, 32
  %v1208 = vpop.permute.xlu0 %1207
  %v1209 = vsel %vm44, %v1208, 0
  %1211 = vmatprep.subr.mxu0 0.0
  %1212 = vmatpush1.msra.mxu0 %v23
  %1213 = vmatprep.subr.mxu0 0.0
  %1214 = vmatpush1.msra.mxu0 %v24
  %1215 = vmatprep.subr.mxu0 0.0
  %1216 = vmatpush1.msra.mxu0 %v25
  %1217 = vmatprep.subr.mxu0 0.0
  %1218 = vmatpush1.msra.mxu0 %v26
  %1219 = vmatprep.subr.mxu0 0.0
  %1220 = vmatpush1.msra.mxu0 0.0
  %1221 = vmatprep.subr.mxu0 0.0
  %1222 = vmatpush1.msra.mxu0 0.0
  %1223 = vmatprep.subr.mxu0 0.0
  %1224 = vmatpush1.msra.mxu0 0.0
  %1225 = vmatprep.subr.mxu0 0.0
  %1226 = vmatpush1.msra.mxu0 0.0
  %1227 = vmatprep.subr.mxu0 0.0
  %1228 = vmatpush1.msra.mxu0 0.0
  %1229 = vmatprep.subr.mxu0 0.0
  %1230 = vmatpush1.msra.mxu0 0.0
  %1231 = vmatprep.subr.mxu0 0.0
  %1232 = vmatpush1.msra.mxu0 0.0
  %1233 = vmatprep.subr.mxu0 0.0
  %1234 = vmatpush1.msra.mxu0 0.0
  %1235 = vmatprep.subr.mxu0 0.0
  %1236 = vmatpush1.msra.mxu0 0.0
  %1237 = vmatprep.subr.mxu0 0.0
  %1238 = vmatpush1.msra.mxu0 0.0
  %1239 = vmatprep.subr.mxu0 0.0
  %1240 = vmatpush1.msra.mxu0 0.0
  %1241 = vmatprep.subr.mxu0 0.0
  %1242 = vmatpush1.msra.mxu0 0.0
  %1243 = vmatprep.subr.mxu0 0.0
  %1244 = vmatpush1.msra.mxu0 0.0
  %1245 = vmatprep.subr.mxu0 0.0
  %1246 = vmatpush1.msra.mxu0 0.0
  %1247 = vmatprep.subr.mxu0 0.0
  %1248 = vmatpush1.msra.mxu0 0.0
  %1249 = vmatprep.subr.mxu0 0.0
  %1250 = vmatpush1.msra.mxu0 0.0
  %1251 = vmatprep.subr.mxu0 0.0
  %1252 = vmatpush1.msra.mxu0 0.0
  %1253 = vmatprep.subr.mxu0 0.0
  %1254 = vmatpush1.msra.mxu0 0.0
  %1255 = vmatprep.subr.mxu0 0.0
  %1256 = vmatpush1.msra.mxu0 0.0
  %1257 = vmatprep.subr.mxu0 0.0
  %1258 = vmatpush1.msra.mxu0 0.0
  %1259 = vmatprep.subr.mxu0 0.0
  %1260 = vmatpush1.msra.mxu0 0.0
  %1261 = vmatprep.subr.mxu0 0.0
  %1262 = vmatpush1.msra.mxu0 0.0
  %1263 = vmatprep.subr.mxu0 0.0
  %1264 = vmatpush1.msra.mxu0 0.0
  %1265 = vmatprep.subr.mxu0 0.0
  %1266 = vmatpush1.msra.mxu0 0.0
  %1267 = vmatprep.subr.mxu0 0.0
  %1268 = vmatpush1.msra.mxu0 0.0
  %1269 = vmatprep.subr.mxu0 0.0
  %1270 = vmatpush1.msra.mxu0 0.0
  %1271 = vmatprep.subr.mxu0 0.0
  %1272 = vmatpush1.msra.mxu0 0.0
  %1273 = vmatprep.subr.mxu0 0.0
  %1274 = vmatpush1.msra.mxu0 0.0
  %1275 = vmatprep.mubr.f32.mxu0 0.0
  %1276 = vmatmul.mubr.f32.gmra.mrb[0].mxu0 %v1209
  %v1277 = vpop.f32.mrb[0].mxu0
  %v1278 = vadd.f32 %v308, %v1277
  %v1279 = vpop.f32.mrb[0].mxu0
  %1280 = vdwg.mxu0
  %v1281 = vld [vmem:[%s2 + $0x50] sm:$0xff]
  %v1282 = vmul.f32 %v1278, %v1281
  %v1283 = vadd.f32 %v1049, %v1282
  %v1284 = vadd.f32 %v1278, %v581
  %v1285 = vmul.f32 %v1284, 1.442695
  %v1286 = vpow.pop %v1285
  %1288 = vset.pattern.permute.xlu0 0
  %1289 = vperm.xlu0 %1288, %v1104
  %v1290 = vpop.permute.xlu0 %1289
  %v1292 = vmul.f32 %v1290, %v177
  %1293 = vset.pattern.permute.xlu0 1
  %1294 = vperm.xlu0 %1293, %v1104
  %v1295 = vpop.permute.xlu0 %1294
  %v1297 = vmul.f32 %v1295, %v181
  %1298 = vset.pattern.permute.xlu0 2
  %1299 = vperm.xlu0 %1298, %v1104
  %v1300 = vpop.permute.xlu0 %1299
  %v1302 = vmul.f32 %v1300, %v185
  %1303 = vset.pattern.permute.xlu0 3
  %1304 = vperm.xlu0 %1303, %v1104
  %v1305 = vpop.permute.xlu0 %1304
  %v1307 = vmul.f32 %v1305, %v189
  %1308 = vset.pattern.permute.xlu0 4
  %1309 = vperm.xlu0 %1308, %v1104
  %v1310 = vpop.permute.xlu0 %1309
  %v1312 = vmul.f32 %v1310, %v193
  %1313 = vset.pattern.permute.xlu0 5
  %1314 = vperm.xlu0 %1313, %v1104
  %v1315 = vpop.permute.xlu0 %1314
  %v1317 = vmul.f32 %v1315, %v197
  %1318 = vset.pattern.permute.xlu0 6
  %1319 = vperm.xlu0 %1318, %v1104
  %v1320 = vpop.permute.xlu0 %1319
  %v1322 = vmul.f32 %v1320, %v201
  %1323 = vset.pattern.permute.xlu0 7
  %1324 = vperm.xlu0 %1323, %v1104
  %v1325 = vpop.permute.xlu0 %1324
  %v1327 = vmul.f32 %v1325, %v205
  %v1328 = vadd.f32 %v1292, %v1297
  %v1329 = vadd.f32 %v1302, %v1307
  %v1330 = vadd.f32 %v1312, %v1317
  %v1331 = vadd.f32 %v1322, %v1327
  %v1332 = vadd.f32 %v1328, %v1329
  %v1333 = vadd.f32 %v1330, %v1331
  %v1334 = vadd.f32 %v1332, %v1333
  %v1335 = vmul.f32 %v1334, %v1286
  %v1336 = vld [vmem:[%s2 + $0x90] sm:$0xff]
  %vm1337 = vcmp.gt.f32.partialorder %v1336, 0.0
  %v1338 = vsel %vm1337, %v1335, %v1104
  %1340 = vrot.lane.b32.xlu0 %v1204, 32
  %v1341 = vpop.permute.xlu0 %1340
  %v1342 = vsel %vm44, %v1341, 0
  %1344 = vmatprep.subr.mxu0 0.0
  %1345 = vmatpush1.msra.mxu0 %v18
  %1346 = vmatprep.subr.mxu0 0.0
  %1347 = vmatpush1.msra.mxu0 %v19
  %1348 = vmatprep.subr.mxu0 0.0
  %1349 = vmatpush1.msra.mxu0 %v20
  %1350 = vmatprep.subr.mxu0 0.0
  %1351 = vmatpush1.msra.mxu0 %v21
  %1352 = vmatprep.subr.mxu0 0.0
  %1353 = vmatpush1.msra.mxu0 0.0
  %1354 = vmatprep.subr.mxu0 0.0
  %1355 = vmatpush1.msra.mxu0 0.0
  %1356 = vmatprep.subr.mxu0 0.0
  %1357 = vmatpush1.msra.mxu0 0.0
  %1358 = vmatprep.subr.mxu0 0.0
  %1359 = vmatpush1.msra.mxu0 0.0
  %1360 = vmatprep.subr.mxu0 0.0
  %1361 = vmatpush1.msra.mxu0 0.0
  %1362 = vmatprep.subr.mxu0 0.0
  %1363 = vmatpush1.msra.mxu0 0.0
  %1364 = vmatprep.subr.mxu0 0.0
  %1365 = vmatpush1.msra.mxu0 0.0
  %1366 = vmatprep.subr.mxu0 0.0
  %1367 = vmatpush1.msra.mxu0 0.0
  %1368 = vmatprep.subr.mxu0 0.0
  %1369 = vmatpush1.msra.mxu0 0.0
  %1370 = vmatprep.subr.mxu0 0.0
  %1371 = vmatpush1.msra.mxu0 0.0
  %1372 = vmatprep.subr.mxu0 0.0
  %1373 = vmatpush1.msra.mxu0 0.0
  %1374 = vmatprep.subr.mxu0 0.0
  %1375 = vmatpush1.msra.mxu0 0.0
  %1376 = vmatprep.subr.mxu0 0.0
  %1377 = vmatpush1.msra.mxu0 0.0
  %1378 = vmatprep.subr.mxu0 0.0
  %1379 = vmatpush1.msra.mxu0 0.0
  %1380 = vmatprep.subr.mxu0 0.0
  %1381 = vmatpush1.msra.mxu0 0.0
  %1382 = vmatprep.subr.mxu0 0.0
  %1383 = vmatpush1.msra.mxu0 0.0
  %1384 = vmatprep.subr.mxu0 0.0
  %1385 = vmatpush1.msra.mxu0 0.0
  %1386 = vmatprep.subr.mxu0 0.0
  %1387 = vmatpush1.msra.mxu0 0.0
  %1388 = vmatprep.subr.mxu0 0.0
  %1389 = vmatpush1.msra.mxu0 0.0
  %1390 = vmatprep.subr.mxu0 0.0
  %1391 = vmatpush1.msra.mxu0 0.0
  %1392 = vmatprep.subr.mxu0 0.0
  %1393 = vmatpush1.msra.mxu0 0.0
  %1394 = vmatprep.subr.mxu0 0.0
  %1395 = vmatpush1.msra.mxu0 0.0
  %1396 = vmatprep.subr.mxu0 0.0
  %1397 = vmatpush1.msra.mxu0 0.0
  %1398 = vmatprep.subr.mxu0 0.0
  %1399 = vmatpush1.msra.mxu0 0.0
  %1400 = vmatprep.subr.mxu0 0.0
  %1401 = vmatpush1.msra.mxu0 0.0
  %1402 = vmatprep.subr.mxu0 0.0
  %1403 = vmatpush1.msra.mxu0 0.0
  %1404 = vmatprep.subr.mxu0 0.0
  %1405 = vmatpush1.msra.mxu0 0.0
  %1406 = vmatprep.subr.mxu0 0.0
  %1407 = vmatpush1.msra.mxu0 0.0
  %1408 = vmatprep.mubr.f32.mxu0 0.0
  %1409 = vmatmul.mubr.f32.gmra.mrb[0].mxu0 %v1342
  %v1410 = vpop.f32.mrb[0].mxu0
  %v1411 = vadd.f32 0.0, %v1410
  %v1412 = vpop.f32.mrb[0].mxu0
  %1413 = vdwg.mxu0
  %v1414 = vadd.f32 %v161, %v1411
  %v1415 = vxor.u32 %v1414, 2147483648
  %v1416 = vmul.f32 %v1415, 1.442695
  %v1417 = vpow.pop %v1416
  %v1418 = vadd.f32 %v1417, 1.0
  %v1419 = vrcp.pop %v1418
  %v1420 = vmul.f32 1.0, %v1419
  %v1421 = vtanh.pop %v1414
  %v1422 = vmul.f32 %v1420, %v1198
  %1424 = vrot.lane.b32.xlu0 %v1421, 64
  %v1425 = vpop.permute.xlu0 %1424
  %v1427 = vmul.f32 %v1420, %v1425
  %1429 = vrot.lane.b32.xlu0 %v1427, 32
  %v1430 = vpop.permute.xlu0 %1429
  %v1432 = vadd.f32 %v1422, %v1430
  %v1433 = vtanh.pop %v1432
  %1435 = vrot.lane.b32.xlu0 %v1433, 64
  %v1436 = vpop.permute.xlu0 %1435
  %v1438 = vmul.f32 %v1420, %v1436
  %v1439 = vmax.f32 %v1438, 0.0
  %1441 = vrot.lane.b32.xlu0 %v1439, 32
  %v1442 = vpop.permute.xlu0 %1441
  %v1443 = vsel %vm44, %v1442, 0
  %1445 = vmatprep.subr.mxu0 0.0
  %1446 = vmatpush1.msra.mxu0 %v23
  %1447 = vmatprep.subr.mxu0 0.0
  %1448 = vmatpush1.msra.mxu0 %v24
  %1449 = vmatprep.subr.mxu0 0.0
  %1450 = vmatpush1.msra.mxu0 %v25
  %1451 = vmatprep.subr.mxu0 0.0
  %1452 = vmatpush1.msra.mxu0 %v26
  %1453 = vmatprep.subr.mxu0 0.0
  %1454 = vmatpush1.msra.mxu0 0.0
  %1455 = vmatprep.subr.mxu0 0.0
  %1456 = vmatpush1.msra.mxu0 0.0
  %1457 = vmatprep.subr.mxu0 0.0
  %1458 = vmatpush1.msra.mxu0 0.0
  %1459 = vmatprep.subr.mxu0 0.0
  %1460 = vmatpush1.msra.mxu0 0.0
  %1461 = vmatprep.subr.mxu0 0.0
  %1462 = vmatpush1.msra.mxu0 0.0
  %1463 = vmatprep.subr.mxu0 0.0
  %1464 = vmatpush1.msra.mxu0 0.0
  %1465 = vmatprep.subr.mxu0 0.0
  %1466 = vmatpush1.msra.mxu0 0.0
  %1467 = vmatprep.subr.mxu0 0.0
  %1468 = vmatpush1.msra.mxu0 0.0
  %1469 = vmatprep.subr.mxu0 0.0
  %1470 = vmatpush1.msra.mxu0 0.0
  %1471 = vmatprep.subr.mxu0 0.0
  %1472 = vmatpush1.msra.mxu0 0.0
  %1473 = vmatprep.subr.mxu0 0.0
  %1474 = vmatpush1.msra.mxu0 0.0
  %1475 = vmatprep.subr.mxu0 0.0
  %1476 = vmatpush1.msra.mxu0 0.0
  %1477 = vmatprep.subr.mxu0 0.0
  %1478 = vmatpush1.msra.mxu0 0.0
  %1479 = vmatprep.subr.mxu0 0.0
  %1480 = vmatpush1.msra.mxu0 0.0
  %1481 = vmatprep.subr.mxu0 0.0
  %1482 = vmatpush1.msra.mxu0 0.0
  %1483 = vmatprep.subr.mxu0 0.0
  %1484 = vmatpush1.msra.mxu0 0.0
  %1485 = vmatprep.subr.mxu0 0.0
  %1486 = vmatpush1.msra.mxu0 0.0
  %1487 = vmatprep.subr.mxu0 0.0
  %1488 = vmatpush1.msra.mxu0 0.0
  %1489 = vmatprep.subr.mxu0 0.0
  %1490 = vmatpush1.msra.mxu0 0.0
  %1491 = vmatprep.subr.mxu0 0.0
  %1492 = vmatpush1.msra.mxu0 0.0
  %1493 = vmatprep.subr.mxu0 0.0
  %1494 = vmatpush1.msra.mxu0 0.0
  %1495 = vmatprep.subr.mxu0 0.0
  %1496 = vmatpush1.msra.mxu0 0.0
  %1497 = vmatprep.subr.mxu0 0.0
  %1498 = vmatpush1.msra.mxu0 0.0
  %1499 = vmatprep.subr.mxu0 0.0
  %1500 = vmatpush1.msra.mxu0 0.0
  %1501 = vmatprep.subr.mxu0 0.0
  %1502 = vmatpush1.msra.mxu0 0.0
  %1503 = vmatprep.subr.mxu0 0.0
  %1504 = vmatpush1.msra.mxu0 0.0
  %1505 = vmatprep.subr.mxu0 0.0
  %1506 = vmatpush1.msra.mxu0 0.0
  %1507 = vmatprep.subr.mxu0 0.0
  %1508 = vmatpush1.msra.mxu0 0.0
  %1509 = vmatprep.mubr.f32.mxu0 0.0
  %1510 = vmatmul.mubr.f32.gmra.mrb[0].mxu0 %v1443
  %v1511 = vpop.f32.mrb[0].mxu0
  %v1512 = vadd.f32 %v308, %v1511
  %v1513 = vpop.f32.mrb[0].mxu0
  %1514 = vdwg.mxu0
  %v1515 = vld [vmem:[%s2 + $0x58] sm:$0xff]
  %v1516 = vmul.f32 %v1512, %v1515
  %v1517 = vadd.f32 %v1283, %v1516
  %v1518 = vadd.f32 %v1512, %v581
  %v1519 = vmul.f32 %v1518, 1.442695
  %v1520 = vpow.pop %v1519
  %1522 = vset.pattern.permute.xlu0 0
  %1523 = vperm.xlu0 %1522, %v1338
  %v1524 = vpop.permute.xlu0 %1523
  %v1526 = vmul.f32 %v1524, %v177
  %1527 = vset.pattern.permute.xlu0 1
  %1528 = vperm.xlu0 %1527, %v1338
  %v1529 = vpop.permute.xlu0 %1528
  %v1531 = vmul.f32 %v1529, %v181
  %1532 = vset.pattern.permute.xlu0 2
  %1533 = vperm.xlu0 %1532, %v1338
  %v1534 = vpop.permute.xlu0 %1533
  %v1536 = vmul.f32 %v1534, %v185
  %1537 = vset.pattern.permute.xlu0 3
  %1538 = vperm.xlu0 %1537, %v1338
  %v1539 = vpop.permute.xlu0 %1538
  %v1541 = vmul.f32 %v1539, %v189
  %1542 = vset.pattern.permute.xlu0 4
  %1543 = vperm.xlu0 %1542, %v1338
  %v1544 = vpop.permute.xlu0 %1543
  %v1546 = vmul.f32 %v1544, %v193
  %1547 = vset.pattern.permute.xlu0 5
  %1548 = vperm.xlu0 %1547, %v1338
  %v1549 = vpop.permute.xlu0 %1548
  %v1551 = vmul.f32 %v1549, %v197
  %1552 = vset.pattern.permute.xlu0 6
  %1553 = vperm.xlu0 %1552, %v1338
  %v1554 = vpop.permute.xlu0 %1553
  %v1556 = vmul.f32 %v1554, %v201
  %1557 = vset.pattern.permute.xlu0 7
  %1558 = vperm.xlu0 %1557, %v1338
  %v1559 = vpop.permute.xlu0 %1558
  %v1561 = vmul.f32 %v1559, %v205
  %v1562 = vadd.f32 %v1526, %v1531
  %v1563 = vadd.f32 %v1536, %v1541
  %v1564 = vadd.f32 %v1546, %v1551
  %v1565 = vadd.f32 %v1556, %v1561
  %v1566 = vadd.f32 %v1562, %v1563
  %v1567 = vadd.f32 %v1564, %v1565
  %v1568 = vadd.f32 %v1566, %v1567
  %v1569 = vmul.f32 %v1568, %v1520
  %v1570 = vld [vmem:[%s2 + $0x98] sm:$0xff]
  %vm1571 = vcmp.gt.f32.partialorder %v1570, 0.0
  %v1572 = vsel %vm1571, %v1569, %v1338
  %1574 = vrot.lane.b32.xlu0 %v1438, 32
  %v1575 = vpop.permute.xlu0 %1574
  %v1576 = vsel %vm44, %v1575, 0
  %1578 = vmatprep.subr.mxu0 0.0
  %1579 = vmatpush1.msra.mxu0 %v18
  %1580 = vmatprep.subr.mxu0 0.0
  %1581 = vmatpush1.msra.mxu0 %v19
  %1582 = vmatprep.subr.mxu0 0.0
  %1583 = vmatpush1.msra.mxu0 %v20
  %1584 = vmatprep.subr.mxu0 0.0
  %1585 = vmatpush1.msra.mxu0 %v21
  %1586 = vmatprep.subr.mxu0 0.0
  %1587 = vmatpush1.msra.mxu0 0.0
  %1588 = vmatprep.subr.mxu0 0.0
  %1589 = vmatpush1.msra.mxu0 0.0
  %1590 = vmatprep.subr.mxu0 0.0
  %1591 = vmatpush1.msra.mxu0 0.0
  %1592 = vmatprep.subr.mxu0 0.0
  %1593 = vmatpush1.msra.mxu0 0.0
  %1594 = vmatprep.subr.mxu0 0.0
  %1595 = vmatpush1.msra.mxu0 0.0
  %1596 = vmatprep.subr.mxu0 0.0
  %1597 = vmatpush1.msra.mxu0 0.0
  %1598 = vmatprep.subr.mxu0 0.0
  %1599 = vmatpush1.msra.mxu0 0.0
  %1600 = vmatprep.subr.mxu0 0.0
  %1601 = vmatpush1.msra.mxu0 0.0
  %1602 = vmatprep.subr.mxu0 0.0
  %1603 = vmatpush1.msra.mxu0 0.0
  %1604 = vmatprep.subr.mxu0 0.0
  %1605 = vmatpush1.msra.mxu0 0.0
  %1606 = vmatprep.subr.mxu0 0.0
  %1607 = vmatpush1.msra.mxu0 0.0
  %1608 = vmatprep.subr.mxu0 0.0
  %1609 = vmatpush1.msra.mxu0 0.0
  %1610 = vmatprep.subr.mxu0 0.0
  %1611 = vmatpush1.msra.mxu0 0.0
  %1612 = vmatprep.subr.mxu0 0.0
  %1613 = vmatpush1.msra.mxu0 0.0
  %1614 = vmatprep.subr.mxu0 0.0
  %1615 = vmatpush1.msra.mxu0 0.0
  %1616 = vmatprep.subr.mxu0 0.0
  %1617 = vmatpush1.msra.mxu0 0.0
  %1618 = vmatprep.subr.mxu0 0.0
  %1619 = vmatpush1.msra.mxu0 0.0
  %1620 = vmatprep.subr.mxu0 0.0
  %1621 = vmatpush1.msra.mxu0 0.0
  %1622 = vmatprep.subr.mxu0 0.0
  %1623 = vmatpush1.msra.mxu0 0.0
  %1624 = vmatprep.subr.mxu0 0.0
  %1625 = vmatpush1.msra.mxu0 0.0
  %1626 = vmatprep.subr.mxu0 0.0
  %1627 = vmatpush1.msra.mxu0 0.0
  %1628 = vmatprep.subr.mxu0 0.0
  %1629 = vmatpush1.msra.mxu0 0.0
  %1630 = vmatprep.subr.mxu0 0.0
  %1631 = vmatpush1.msra.mxu0 0.0
  %1632 = vmatprep.subr.mxu0 0.0
  %1633 = vmatpush1.msra.mxu0 0.0
  %1634 = vmatprep.subr.mxu0 0.0
  %1635 = vmatpush1.msra.mxu0 0.0
  %1636 = vmatprep.subr.mxu0 0.0
  %1637 = vmatpush1.msra.mxu0 0.0
  %1638 = vmatprep.subr.mxu0 0.0
  %1639 = vmatpush1.msra.mxu0 0.0
  %1640 = vmatprep.subr.mxu0 0.0
  %1641 = vmatpush1.msra.mxu0 0.0
  %1642 = vmatprep.mubr.f32.mxu0 0.0
  %1643 = vmatmul.mubr.f32.gmra.mrb[0].mxu0 %v1576
  %v1644 = vpop.f32.mrb[0].mxu0
  %v1645 = vadd.f32 0.0, %v1644
  %v1646 = vpop.f32.mrb[0].mxu0
  %1647 = vdwg.mxu0
  %v1648 = vadd.f32 %v166, %v1645
  %v1649 = vxor.u32 %v1648, 2147483648
  %v1650 = vmul.f32 %v1649, 1.442695
  %v1651 = vpow.pop %v1650
  %v1652 = vadd.f32 %v1651, 1.0
  %v1653 = vrcp.pop %v1652
  %v1654 = vmul.f32 1.0, %v1653
  %v1655 = vtanh.pop %v1648
  %v1656 = vmul.f32 %v1654, %v1432
  %1658 = vrot.lane.b32.xlu0 %v1655, 64
  %v1659 = vpop.permute.xlu0 %1658
  %v1661 = vmul.f32 %v1654, %v1659
  %1663 = vrot.lane.b32.xlu0 %v1661, 32
  %v1664 = vpop.permute.xlu0 %1663
  %v1666 = vadd.f32 %v1656, %v1664
  %v1667 = vtanh.pop %v1666
  %1669 = vrot.lane.b32.xlu0 %v1667, 64
  %v1670 = vpop.permute.xlu0 %1669
  %v1672 = vmul.f32 %v1654, %v1670
  %v1673 = vmax.f32 %v1672, 0.0
  %1675 = vrot.lane.b32.xlu0 %v1673, 32
  %v1676 = vpop.permute.xlu0 %1675
  %v1677 = vsel %vm44, %v1676, 0
  %1679 = vmatprep.subr.mxu0 0.0
  %1680 = vmatpush1.msra.mxu0 %v23
  %1681 = vmatprep.subr.mxu0 0.0
  %1682 = vmatpush1.msra.mxu0 %v24
  %1683 = vmatprep.subr.mxu0 0.0
  %1684 = vmatpush1.msra.mxu0 %v25
  %1685 = vmatprep.subr.mxu0 0.0
  %1686 = vmatpush1.msra.mxu0 %v26
  %1687 = vmatprep.subr.mxu0 0.0
  %1688 = vmatpush1.msra.mxu0 0.0
  %1689 = vmatprep.subr.mxu0 0.0
  %1690 = vmatpush1.msra.mxu0 0.0
  %1691 = vmatprep.subr.mxu0 0.0
  %1692 = vmatpush1.msra.mxu0 0.0
  %1693 = vmatprep.subr.mxu0 0.0
  %1694 = vmatpush1.msra.mxu0 0.0
  %1695 = vmatprep.subr.mxu0 0.0
  %1696 = vmatpush1.msra.mxu0 0.0
  %1697 = vmatprep.subr.mxu0 0.0
  %1698 = vmatpush1.msra.mxu0 0.0
  %1699 = vmatprep.subr.mxu0 0.0
  %1700 = vmatpush1.msra.mxu0 0.0
  %1701 = vmatprep.subr.mxu0 0.0
  %1702 = vmatpush1.msra.mxu0 0.0
  %1703 = vmatprep.subr.mxu0 0.0
  %1704 = vmatpush1.msra.mxu0 0.0
  %1705 = vmatprep.subr.mxu0 0.0
  %1706 = vmatpush1.msra.mxu0 0.0
  %1707 = vmatprep.subr.mxu0 0.0
  %1708 = vmatpush1.msra.mxu0 0.0
  %1709 = vmatprep.subr.mxu0 0.0
  %1710 = vmatpush1.msra.mxu0 0.0
  %1711 = vmatprep.subr.mxu0 0.0
  %1712 = vmatpush1.msra.mxu0 0.0
  %1713 = vmatprep.subr.mxu0 0.0
  %1714 = vmatpush1.msra.mxu0 0.0
  %1715 = vmatprep.subr.mxu0 0.0
  %1716 = vmatpush1.msra.mxu0 0.0
  %1717 = vmatprep.subr.mxu0 0.0
  %1718 = vmatpush1.msra.mxu0 0.0
  %1719 = vmatprep.subr.mxu0 0.0
  %1720 = vmatpush1.msra.mxu0 0.0
  %1721 = vmatprep.subr.mxu0 0.0
  %1722 = vmatpush1.msra.mxu0 0.0
  %1723 = vmatprep.subr.mxu0 0.0
  %1724 = vmatpush1.msra.mxu0 0.0
  %1725 = vmatprep.subr.mxu0 0.0
  %1726 = vmatpush1.msra.mxu0 0.0
  %1727 = vmatprep.subr.mxu0 0.0
  %1728 = vmatpush1.msra.mxu0 0.0
  %1729 = vmatprep.subr.mxu0 0.0
  %1730 = vmatpush1.msra.mxu0 0.0
  %1731 = vmatprep.subr.mxu0 0.0
  %1732 = vmatpush1.msra.mxu0 0.0
  %1733 = vmatprep.subr.mxu0 0.0
  %1734 = vmatpush1.msra.mxu0 0.0
  %1735 = vmatprep.subr.mxu0 0.0
  %1736 = vmatpush1.msra.mxu0 0.0
  %1737 = vmatprep.subr.mxu0 0.0
  %1738 = vmatpush1.msra.mxu0 0.0
  %1739 = vmatprep.subr.mxu0 0.0
  %1740 = vmatpush1.msra.mxu0 0.0
  %1741 = vmatprep.subr.mxu0 0.0
  %1742 = vmatpush1.msra.mxu0 0.0
  %1743 = vmatprep.mubr.f32.mxu0 0.0
  %1744 = vmatmul.mubr.f32.gmra.mrb[0].mxu0 %v1677
  %v1745 = vpop.f32.mrb[0].mxu0
  %v1746 = vadd.f32 %v308, %v1745
  %v1747 = vpop.f32.mrb[0].mxu0
  %1748 = vdwg.mxu0
  %v1749 = vld [vmem:[%s2 + $0x60] sm:$0xff]
  %v1750 = vmul.f32 %v1746, %v1749
  %v1751 = vadd.f32 %v1517, %v1750
  %v1752 = vadd.f32 %v1746, %v581
  %v1753 = vmul.f32 %v1752, 1.442695
  %v1754 = vpow.pop %v1753
  %1756 = vset.pattern.permute.xlu0 0
  %1757 = vperm.xlu0 %1756, %v1572
  %v1758 = vpop.permute.xlu0 %1757
  %v1760 = vmul.f32 %v1758, %v177
  %1761 = vset.pattern.permute.xlu0 1
  %1762 = vperm.xlu0 %1761, %v1572
  %v1763 = vpop.permute.xlu0 %1762
  %v1765 = vmul.f32 %v1763, %v181
  %1766 = vset.pattern.permute.xlu0 2
  %1767 = vperm.xlu0 %1766, %v1572
  %v1768 = vpop.permute.xlu0 %1767
  %v1770 = vmul.f32 %v1768, %v185
  %1771 = vset.pattern.permute.xlu0 3
  %1772 = vperm.xlu0 %1771, %v1572
  %v1773 = vpop.permute.xlu0 %1772
  %v1775 = vmul.f32 %v1773, %v189
  %1776 = vset.pattern.permute.xlu0 4
  %1777 = vperm.xlu0 %1776, %v1572
  %v1778 = vpop.permute.xlu0 %1777
  %v1780 = vmul.f32 %v1778, %v193
  %1781 = vset.pattern.permute.xlu0 5
  %1782 = vperm.xlu0 %1781, %v1572
  %v1783 = vpop.permute.xlu0 %1782
  %v1785 = vmul.f32 %v1783, %v197
  %1786 = vset.pattern.permute.xlu0 6
  %1787 = vperm.xlu0 %1786, %v1572
  %v1788 = vpop.permute.xlu0 %1787
  %v1790 = vmul.f32 %v1788, %v201
  %1791 = vset.pattern.permute.xlu0 7
  %1792 = vperm.xlu0 %1791, %v1572
  %v1793 = vpop.permute.xlu0 %1792
  %v1795 = vmul.f32 %v1793, %v205
  %v1796 = vadd.f32 %v1760, %v1765
  %v1797 = vadd.f32 %v1770, %v1775
  %v1798 = vadd.f32 %v1780, %v1785
  %v1799 = vadd.f32 %v1790, %v1795
  %v1800 = vadd.f32 %v1796, %v1797
  %v1801 = vadd.f32 %v1798, %v1799
  %v1802 = vadd.f32 %v1800, %v1801
  %v1803 = vmul.f32 %v1802, %v1754
  %v1804 = vld [vmem:[%s2 + $0xa0] sm:$0xff]
  %vm1805 = vcmp.gt.f32.partialorder %v1804, 0.0
  %v1806 = vsel %vm1805, %v1803, %v1572
  %1808 = vrot.lane.b32.xlu0 %v1672, 32
  %v1809 = vpop.permute.xlu0 %1808
  %v1810 = vsel %vm44, %v1809, 0
  %1812 = vmatprep.subr.mxu0 0.0
  %1813 = vmatpush1.msra.mxu0 %v18
  %1814 = vmatprep.subr.mxu0 0.0
  %1815 = vmatpush1.msra.mxu0 %v19
  %1816 = vmatprep.subr.mxu0 0.0
  %1817 = vmatpush1.msra.mxu0 %v20
  %1818 = vmatprep.subr.mxu0 0.0
  %1819 = vmatpush1.msra.mxu0 %v21
  %1820 = vmatprep.subr.mxu0 0.0
  %1821 = vmatpush1.msra.mxu0 0.0
  %1822 = vmatprep.subr.mxu0 0.0
  %1823 = vmatpush1.msra.mxu0 0.0
  %1824 = vmatprep.subr.mxu0 0.0
  %1825 = vmatpush1.msra.mxu0 0.0
  %1826 = vmatprep.subr.mxu0 0.0
  %1827 = vmatpush1.msra.mxu0 0.0
  %1828 = vmatprep.subr.mxu0 0.0
  %1829 = vmatpush1.msra.mxu0 0.0
  %1830 = vmatprep.subr.mxu0 0.0
  %1831 = vmatpush1.msra.mxu0 0.0
  %1832 = vmatprep.subr.mxu0 0.0
  %1833 = vmatpush1.msra.mxu0 0.0
  %1834 = vmatprep.subr.mxu0 0.0
  %1835 = vmatpush1.msra.mxu0 0.0
  %1836 = vmatprep.subr.mxu0 0.0
  %1837 = vmatpush1.msra.mxu0 0.0
  %1838 = vmatprep.subr.mxu0 0.0
  %1839 = vmatpush1.msra.mxu0 0.0
  %1840 = vmatprep.subr.mxu0 0.0
  %1841 = vmatpush1.msra.mxu0 0.0
  %1842 = vmatprep.subr.mxu0 0.0
  %1843 = vmatpush1.msra.mxu0 0.0
  %1844 = vmatprep.subr.mxu0 0.0
  %1845 = vmatpush1.msra.mxu0 0.0
  %1846 = vmatprep.subr.mxu0 0.0
  %1847 = vmatpush1.msra.mxu0 0.0
  %1848 = vmatprep.subr.mxu0 0.0
  %1849 = vmatpush1.msra.mxu0 0.0
  %1850 = vmatprep.subr.mxu0 0.0
  %1851 = vmatpush1.msra.mxu0 0.0
  %1852 = vmatprep.subr.mxu0 0.0
  %1853 = vmatpush1.msra.mxu0 0.0
  %1854 = vmatprep.subr.mxu0 0.0
  %1855 = vmatpush1.msra.mxu0 0.0
  %1856 = vmatprep.subr.mxu0 0.0
  %1857 = vmatpush1.msra.mxu0 0.0
  %1858 = vmatprep.subr.mxu0 0.0
  %1859 = vmatpush1.msra.mxu0 0.0
  %1860 = vmatprep.subr.mxu0 0.0
  %1861 = vmatpush1.msra.mxu0 0.0
  %1862 = vmatprep.subr.mxu0 0.0
  %1863 = vmatpush1.msra.mxu0 0.0
  %1864 = vmatprep.subr.mxu0 0.0
  %1865 = vmatpush1.msra.mxu0 0.0
  %1866 = vmatprep.subr.mxu0 0.0
  %1867 = vmatpush1.msra.mxu0 0.0
  %1868 = vmatprep.subr.mxu0 0.0
  %1869 = vmatpush1.msra.mxu0 0.0
  %1870 = vmatprep.subr.mxu0 0.0
  %1871 = vmatpush1.msra.mxu0 0.0
  %1872 = vmatprep.subr.mxu0 0.0
  %1873 = vmatpush1.msra.mxu0 0.0
  %1874 = vmatprep.subr.mxu0 0.0
  %1875 = vmatpush1.msra.mxu0 0.0
  %1876 = vmatprep.mubr.f32.mxu0 0.0
  %1877 = vmatmul.mubr.f32.gmra.mrb[0].mxu0 %v1810
  %v1878 = vpop.f32.mrb[0].mxu0
  %v1879 = vadd.f32 0.0, %v1878
  %v1880 = vpop.f32.mrb[0].mxu0
  %1881 = vdwg.mxu0
  %v1882 = vadd.f32 %v171, %v1879
  %v1883 = vxor.u32 %v1882, 2147483648
  %v1884 = vmul.f32 %v1883, 1.442695
  %v1885 = vpow.pop %v1884
  %v1886 = vadd.f32 %v1885, 1.0
  %v1887 = vrcp.pop %v1886
  %v1888 = vmul.f32 1.0, %v1887
  %v1889 = vtanh.pop %v1882
  %v1890 = vmul.f32 %v1888, %v1666
  %1892 = vrot.lane.b32.xlu0 %v1889, 64
  %v1893 = vpop.permute.xlu0 %1892
  %v1895 = vmul.f32 %v1888, %v1893
  %1897 = vrot.lane.b32.xlu0 %v1895, 32
  %v1898 = vpop.permute.xlu0 %1897
  %v1900 = vadd.f32 %v1890, %v1898
  %v1901 = vtanh.pop %v1900
  %1903 = vrot.lane.b32.xlu0 %v1901, 64
  %v1904 = vpop.permute.xlu0 %1903
  %v1906 = vmul.f32 %v1888, %v1904
  %v1907 = vmax.f32 %v1906, 0.0
  %1909 = vrot.lane.b32.xlu0 %v1907, 32
  %v1910 = vpop.permute.xlu0 %1909
  %v1911 = vsel %vm44, %v1910, 0
  %1913 = vmatprep.subr.mxu0 0.0
  %1914 = vmatpush1.msra.mxu0 %v23
  %1915 = vmatprep.subr.mxu0 0.0
  %1916 = vmatpush1.msra.mxu0 %v24
  %1917 = vmatprep.subr.mxu0 0.0
  %1918 = vmatpush1.msra.mxu0 %v25
  %1919 = vmatprep.subr.mxu0 0.0
  %1920 = vmatpush1.msra.mxu0 %v26
  %1921 = vmatprep.subr.mxu0 0.0
  %1922 = vmatpush1.msra.mxu0 0.0
  %1923 = vmatprep.subr.mxu0 0.0
  %1924 = vmatpush1.msra.mxu0 0.0
  %1925 = vmatprep.subr.mxu0 0.0
  %1926 = vmatpush1.msra.mxu0 0.0
  %1927 = vmatprep.subr.mxu0 0.0
  %1928 = vmatpush1.msra.mxu0 0.0
  %1929 = vmatprep.subr.mxu0 0.0
  %1930 = vmatpush1.msra.mxu0 0.0
  %1931 = vmatprep.subr.mxu0 0.0
  %1932 = vmatpush1.msra.mxu0 0.0
  %1933 = vmatprep.subr.mxu0 0.0
  %1934 = vmatpush1.msra.mxu0 0.0
  %1935 = vmatprep.subr.mxu0 0.0
  %1936 = vmatpush1.msra.mxu0 0.0
  %1937 = vmatprep.subr.mxu0 0.0
  %1938 = vmatpush1.msra.mxu0 0.0
  %1939 = vmatprep.subr.mxu0 0.0
  %1940 = vmatpush1.msra.mxu0 0.0
  %1941 = vmatprep.subr.mxu0 0.0
  %1942 = vmatpush1.msra.mxu0 0.0
  %1943 = vmatprep.subr.mxu0 0.0
  %1944 = vmatpush1.msra.mxu0 0.0
  %1945 = vmatprep.subr.mxu0 0.0
  %1946 = vmatpush1.msra.mxu0 0.0
  %1947 = vmatprep.subr.mxu0 0.0
  %1948 = vmatpush1.msra.mxu0 0.0
  %1949 = vmatprep.subr.mxu0 0.0
  %1950 = vmatpush1.msra.mxu0 0.0
  %1951 = vmatprep.subr.mxu0 0.0
  %1952 = vmatpush1.msra.mxu0 0.0
  %1953 = vmatprep.subr.mxu0 0.0
  %1954 = vmatpush1.msra.mxu0 0.0
  %1955 = vmatprep.subr.mxu0 0.0
  %1956 = vmatpush1.msra.mxu0 0.0
  %1957 = vmatprep.subr.mxu0 0.0
  %1958 = vmatpush1.msra.mxu0 0.0
  %1959 = vmatprep.subr.mxu0 0.0
  %1960 = vmatpush1.msra.mxu0 0.0
  %1961 = vmatprep.subr.mxu0 0.0
  %1962 = vmatpush1.msra.mxu0 0.0
  %1963 = vmatprep.subr.mxu0 0.0
  %1964 = vmatpush1.msra.mxu0 0.0
  %1965 = vmatprep.subr.mxu0 0.0
  %1966 = vmatpush1.msra.mxu0 0.0
  %1967 = vmatprep.subr.mxu0 0.0
  %1968 = vmatpush1.msra.mxu0 0.0
  %1969 = vmatprep.subr.mxu0 0.0
  %1970 = vmatpush1.msra.mxu0 0.0
  %1971 = vmatprep.subr.mxu0 0.0
  %1972 = vmatpush1.msra.mxu0 0.0
  %1973 = vmatprep.subr.mxu0 0.0
  %1974 = vmatpush1.msra.mxu0 0.0
  %1975 = vmatprep.subr.mxu0 0.0
  %1976 = vmatpush1.msra.mxu0 0.0
  %1977 = vmatprep.mubr.f32.mxu0 0.0
  %1978 = vmatmul.mubr.f32.gmra.mrb[0].mxu0 %v1911
  %v1979 = vpop.f32.mrb[0].mxu0
  %v1980 = vadd.f32 %v308, %v1979
  %v1981 = vpop.f32.mrb[0].mxu0
  %1982 = vdwg.mxu0
  %v1983 = vld [vmem:[%s2 + $0x68] sm:$0xff]
  %v1984 = vmul.f32 %v1980, %v1983
  %v1985 = vadd.f32 %v1751, %v1984
  %v1986 = vadd.f32 %v1980, %v581
  %v1987 = vmul.f32 %v1986, 1.442695
  %v1988 = vpow.pop %v1987
  %1990 = vset.pattern.permute.xlu0 0
  %1991 = vperm.xlu0 %1990, %v1806
  %v1992 = vpop.permute.xlu0 %1991
  %v1994 = vmul.f32 %v1992, %v177
  %1995 = vset.pattern.permute.xlu0 1
  %1996 = vperm.xlu0 %1995, %v1806
  %v1997 = vpop.permute.xlu0 %1996
  %v1999 = vmul.f32 %v1997, %v181
  %2000 = vset.pattern.permute.xlu0 2
  %2001 = vperm.xlu0 %2000, %v1806
  %v2002 = vpop.permute.xlu0 %2001
  %v2004 = vmul.f32 %v2002, %v185
  %2005 = vset.pattern.permute.xlu0 3
  %2006 = vperm.xlu0 %2005, %v1806
  %v2007 = vpop.permute.xlu0 %2006
  %v2009 = vmul.f32 %v2007, %v189
  %2010 = vset.pattern.permute.xlu0 4
  %2011 = vperm.xlu0 %2010, %v1806
  %v2012 = vpop.permute.xlu0 %2011
  %v2014 = vmul.f32 %v2012, %v193
  %2015 = vset.pattern.permute.xlu0 5
  %2016 = vperm.xlu0 %2015, %v1806
  %v2017 = vpop.permute.xlu0 %2016
  %v2019 = vmul.f32 %v2017, %v197
  %2020 = vset.pattern.permute.xlu0 6
  %2021 = vperm.xlu0 %2020, %v1806
  %v2022 = vpop.permute.xlu0 %2021
  %v2024 = vmul.f32 %v2022, %v201
  %2025 = vset.pattern.permute.xlu0 7
  %2026 = vperm.xlu0 %2025, %v1806
  %v2027 = vpop.permute.xlu0 %2026
  %v2029 = vmul.f32 %v2027, %v205
  %v2030 = vadd.f32 %v1994, %v1999
  %v2031 = vadd.f32 %v2004, %v2009
  %v2032 = vadd.f32 %v2014, %v2019
  %v2033 = vadd.f32 %v2024, %v2029
  %v2034 = vadd.f32 %v2030, %v2031
  %v2035 = vadd.f32 %v2032, %v2033
  %v2036 = vadd.f32 %v2034, %v2035
  %v2037 = vmul.f32 %v2036, %v1988
  %v2038 = vld [vmem:[%s2 + $0xa8] sm:$0xff]
  %vm2039 = vcmp.gt.f32.partialorder %v2038, 0.0
  %v2040 = vsel %vm2039, %v2037, %v1806
  %v2041 = vlaneseq
  %v2042 = vshrl.u32 %v2041, 7
  %v2043 = vsub.s32 0, %v2042
  %v2044 = vrot.slane %v30, %v2043
  %v2045 = vmul.f32 %v2040, %v2044
  %v2046 = vsel %vm392, %v2045, 0.0
  %2047 = vadd.xlane.f32.xlu0 %v2046
  %v2048 = vpop.xlane.xlu0 %2047
  %v2049 = vlog2.pop %v2048
  %v2050 = vmul.f32 %v2049, 0.6931472
  %v2051 = vadd.f32 %v395, %v2050
  %v2052 = vsel %vm392, %v1985, 0.0
  %2053 = vadd.xlane.f32.xlu0 %v2052
  %v2054 = vpop.xlane.xlu0 %2053
  %v2055 = vsub.f32 %v2051, %v2054
  %2056 = vst [vmem:[%s3] sm:$0xff] %v2055
  // Predicated region
  $region14: #{entity_labeler_loss.1} parent=0 // pred_check
    _
  $region15: #{entity_labeler_loss.1} parent=0 // pred_check_branch
    %2058 = sbr.rel (0) target = $region17
  $region16: #{entity_labeler_loss.1} parent=0 // pred_region
    _
  $region17: #{entity_labeler_loss.1} parent=0 // pred_fallthru
    _
  // Predicated region
  $region18: #{entity_labeler_loss.1} parent=0 // pred_check
    _
  $region19: #{entity_labeler_loss.1} parent=0 // pred_check_branch
    %2060 = sbr.rel (0) target = $region21
  $region20: #{entity_labeler_loss.1} parent=0 // pred_region
    _
  $region21: #{entity_labeler_loss.1} parent=0 // pred_fallthru
    _

</llo_original>
